<compile_context>
chip_gen: v6e
topology: v6e:2x2x1
jax: 0.10.0
libtpu: 0.0.40
codegen_flags: <defaults>
</compile_context>

<pallas_src>
import functools
import math

import jax
import jax.numpy as jnp
from jax import lax
from jax.experimental import pallas as pl
from jax.experimental.pallas import tpu as pltpu

H = 100          # hidden_size (module default)
H_PAD = 128      # lane-aligned hidden size
G4 = 4 * H_PAD   # stacked gates, each padded to 128 lanes

# kernel gate slot -> PyTorch gate index, layout (i, f, o, g)
GATE_ORDER = (0, 1, 3, 2)


def _lstm_kernel(seq_len, x_ref, wih_ref, whh_ref, b_ref, h_out_ref, xw_ref):
    """One batch tile of independent windows.

    x_ref    : (B_TILE, L)          f32   per-window scalar inputs
    wih_ref  : (1, G4)              f32   input->gate weights (order i,f,o,g)
    whh_ref  : (H_PAD, G4)          bf16  recurrent weights (padded rows/cols = 0)
    b_ref    : (1, G4)              f32   b_ih + b_hh (padded lanes = 0)
    h_out_ref: (B_TILE, H_PAD)      f32   last hidden state (lane-dense output)
    xw_ref   : (L, B_TILE, G4)      f32   VMEM scratch for input contributions
    """
    b_tile = x_ref.shape[0]
    x = x_ref[...]
    wih = wih_ref[...]
    bias = b_ref[...]

    # Stage per-step input contribution + bias once, off the serial chain:
    # xw[t] = x[:, t] (outer) wih + bias   (input_size == 1 -> outer product)
    for t in range(seq_len):
        xw_ref[t] = x[:, t:t + 1] * wih + bias

    # Recurrent weights stay resident across all timesteps.
    whh = whh_ref[...]                                  # (128, 512) bf16

    # Padded-lane invariance (load-bearing!): lanes H..H_PAD-1 of h and c stay
    # exactly 0 because (a) h0 = c0 = 0, (b) padded columns of whh/wih/bias are
    # 0, and (c) sigmoid(0) = 0.5, tanh(0) = 0 => c_pad = 0.5*0 + 0.5*0 = 0.
    # Do NOT seed nonzero state or switch to an approximate sigmoid without
    # explicitly masking lanes >= H.
    h = jnp.zeros((b_tile, H_PAD), jnp.float32)
    c = jnp.zeros((b_tile, H_PAD), jnp.float32)

    def step(xw_t, h, c):
        pre = xw_t + jnp.dot(h.astype(jnp.bfloat16), whh,
                             preferred_element_type=jnp.float32)
        # Gate layout (i, f, o, g): one contiguous sigmoid slab via the exact
        # identity sigmoid(x) = 0.5 * (tanh(x/2) + 1).
        sig = 0.5 * (jnp.tanh(0.5 * pre[:, :3 * H_PAD]) + 1.0)
        i = sig[:, 0 * H_PAD:1 * H_PAD]
        f = sig[:, 1 * H_PAD:2 * H_PAD]
        o = sig[:, 2 * H_PAD:3 * H_PAD]
        g = jnp.tanh(pre[:, 3 * H_PAD:4 * H_PAD])
        c = f * c + i * g
        h = o * jnp.tanh(c)
        return h, c

    if seq_len <= 32:
        # Short static windows: full unroll — LLO sees the whole serial chain.
        for t in range(seq_len):
            h, c = step(xw_ref[t], h, c)
    else:
        # Long windows: bounded code size, partial unroll for scheduling slack.
        def body(t, carry):
            hh, cc = carry
            return step(xw_ref[t], hh, cc)
        h, c = lax.fori_loop(0, seq_len, body, (h, c), unroll=8)

    h_out_ref[...] = h


def _round_up(n, m):
    return ((n + m - 1) // m) * m


def _pad_gates(w, cols_pad):
    """(4H, C) in PyTorch gate order (i,f,g,o) -> (4*H_PAD, cols_pad) in kernel
    gate order (i,f,o,g), each gate block zero-padded to H_PAD rows."""
    out = jnp.zeros((G4, cols_pad), jnp.float32)
    c = w.shape[1]
    for slot, src in enumerate(GATE_ORDER):
        out = out.at[slot * H_PAD:slot * H_PAD + H, :c].set(
            w[src * H:(src + 1) * H, :])
    return out


def lstm_forward_batched(windows, w_ih, w_hh, b_ih, b_hh, w_lin, b_lin,
                         *, b_tile=None):
    """Batched LSTMnetwork forward: windows (B, L) -> pred (B, 1).

    Each row is an independent series window run through the zero-initial-state
    LSTM; returns Linear(h_L) per window (== the module's pred[-1] per window).
    """
    B, L = int(windows.shape[0]), int(windows.shape[1])
    f32 = jnp.float32

    # Parameter padding / reordering (plain-JAX glue).
    wih_row = _pad_gates(w_ih.astype(f32), 1).T                           # (1, 512)
    whh_pad = _pad_gates(w_hh.astype(f32), H_PAD).T.astype(jnp.bfloat16)  # (128, 512)
    bias_row = _pad_gates((b_ih + b_hh).astype(f32)[:, None], 1).T        # (1, 512)

    if b_tile is None:
        # Fill sublanes; 256 rows fill the v6e/v7x MXU, and >1 tile lets the
        # parallel batch-tile axis shard windows across v7x's two TensorCores.
        b_tile = min(256, _round_up(B, 8))
    assert b_tile % 8 == 0
    b_pad = _round_up(B, b_tile)
    x = jnp.zeros((b_pad, L), f32).at[:B, :].set(windows.astype(f32))

    h_last = pl.pallas_call(
        functools.partial(_lstm_kernel, L),
        out_shape=jax.ShapeDtypeStruct((b_pad, H_PAD), f32),
        grid=(b_pad // b_tile,),
        in_specs=[
            pl.BlockSpec((b_tile, L), lambda i: (i, 0)),     # per-tile windows
            pl.BlockSpec((1, G4), lambda i: (0, 0)),         # wih (broadcast)
            pl.BlockSpec((H_PAD, G4), lambda i: (0, 0)),     # whh (broadcast)
            pl.BlockSpec((1, G4), lambda i: (0, 0)),         # bias (broadcast)
        ],
        out_specs=pl.BlockSpec((b_tile, H_PAD), lambda i: (i, 0)),
        scratch_shapes=[pltpu.VMEM((L, b_tile, G4), f32)],
        compiler_params=pltpu.CompilerParams(
            dimension_semantics=("parallel",)),
    )(x, wih_row, whh_pad, bias_row)

    # 100 -> 1 Linear in the XLA wrapper (kernel output stays lane-dense).
    pred = h_last[:B, :H] @ w_lin.astype(f32).T + b_lin.astype(f32)
    return pred


def lstm_forward_pallas(seq, w_ih, w_hh, b_ih, b_hh, w_lin, b_lin):
    """Equivalent of LSTMnetwork.forward(seq) -> pred[-1] (shape (1,)).

    # TODO(synk): the PyTorch module carries self.hidden across forward()
    # calls; this kernel assumes the fresh zero initial state the module is
    # constructed with (the standard per-window usage pattern).
    """
    pred = lstm_forward_batched(seq.reshape(1, -1), w_ih, w_hh, b_ih, b_hh,
                                w_lin, b_lin, b_tile=8)
    return pred[0]


def lstm_forward_ref(seq, w_ih, w_hh, b_ih, b_hh, w_lin, b_lin):
    """Pure-JAX reference matching PyTorch nn.LSTM + nn.Linear semantics."""
    def step(carry, x_t):
        h, c = carry
        pre = w_ih @ x_t + w_hh @ h + b_ih + b_hh
        i = jax.nn.sigmoid(pre[0 * H:1 * H])
        f = jax.nn.sigmoid(pre[1 * H:2 * H])
        g = jnp.tanh(pre[2 * H:3 * H])
        o = jax.nn.sigmoid(pre[3 * H:4 * H])
        c = f * c + i * g
        h = o * jnp.tanh(c)
        return (h, c), h

    init = (jnp.zeros(H, jnp.float32), jnp.zeros(H, jnp.float32))
    (_, _), hs = lax.scan(step, init, seq.astype(jnp.float32).reshape(-1, 1))
    pred = hs @ w_lin.T + b_lin            # (L, 1)
    return pred[-1]


if __name__ == "__main__":
    key = jax.random.PRNGKey(0)
    ks = jax.random.split(key, 7)
    std = 1.0 / math.sqrt(H)

    # nn.LSTM(1, 100) + nn.Linear(100, 1) parameters (deterministic init).
    w_ih = jax.random.uniform(ks[0], (4 * H, 1), jnp.float32, -std, std)
    w_hh = jax.random.uniform(ks[1], (4 * H, H), jnp.float32, -std, std)
    b_ih = jax.random.uniform(ks[2], (4 * H,), jnp.float32, -std, std)
    b_hh = jax.random.uniform(ks[3], (4 * H,), jnp.float32, -std, std)
    w_lin = jax.random.uniform(ks[4], (1, H), jnp.float32, -std, std)
    b_lin = jax.random.uniform(ks[5], (1,), jnp.float32, -std, std)

    B, L = 16, 8                                        # 16 windows of length 8
    windows = jax.random.normal(ks[6], (B, L), jnp.float32)

    # Batched path (b_tile=8 -> grid=(2,), exercises the parallel batch-tile axis).
    pred_b = lstm_forward_batched(windows, w_ih, w_hh, b_ih, b_hh, w_lin, b_lin,
                                  b_tile=8)
    pred_b = jax.block_until_ready(pred_b)
    assert pred_b.shape == (B, 1)

    ref_b = jax.vmap(
        lambda s: lstm_forward_ref(s, w_ih, w_hh, b_ih, b_hh, w_lin, b_lin)
    )(windows)
    # bf16 recurrent-matmul operands (f32 accumulation / f32 state) -> ~1e-3 drift.
    assert jnp.allclose(pred_b, ref_b, atol=5e-3, rtol=5e-3), (pred_b, ref_b)

    # Single-sequence module interface: forward(seq) -> pred[-1], shape (1,).
    pred_1 = lstm_forward_pallas(windows[0], w_ih, w_hh, b_ih, b_hh, w_lin, b_lin)
    pred_1 = jax.block_until_ready(pred_1)
    assert pred_1.shape == (1,)
    assert jnp.allclose(pred_1, ref_b[0], atol=5e-3, rtol=5e-3), (pred_1, ref_b[0])

    print("KERNEL_OK")
</pallas_src>

<mosaic_0001>
module attributes {stable_mosaic.version = 11 : i64} {
  func.func @_lstm_kernel(%arg0: i32, %arg1: memref<8x8xf32, #tpu.memory_space<vmem>>, %arg2: memref<1x512xf32, #tpu.memory_space<vmem>>, %arg3: memref<128x512xbf16, #tpu.memory_space<vmem>>, %arg4: memref<1x512xf32, #tpu.memory_space<vmem>>, %arg5: memref<8x128xf32, #tpu.memory_space<vmem>>, %arg6: memref<8x8x512xf32, #tpu.memory_space<vmem>>) attributes {dimension_semantics = [#tpu.dimension_semantics<parallel>], iteration_bounds = array<i64: 2>, scalar_prefetch = 0 : i64, scratch_operands = 1 : i64, tpu.core_type = #tpu.core_type<tc>, window_params = [{transform_indices = @transform_0, window_bounds = array<i64: 8, 8>}, {pipeline_mode = #tpu.pipeline_mode<synchronous>, transform_indices = @transform_1, window_bounds = array<i64: 1, 512>}, {pipeline_mode = #tpu.pipeline_mode<synchronous>, transform_indices = @transform_2, window_bounds = array<i64: 128, 512>}, {pipeline_mode = #tpu.pipeline_mode<synchronous>, transform_indices = @transform_3, window_bounds = array<i64: 1, 512>}, {transform_indices = @transform_4, window_bounds = array<i64: 8, 128>}]} {
    %c0 = arith.constant 0 : index
    %c0_0 = arith.constant 0 : index
    %0 = vector.load %arg1[%c0, %c0_0] : memref<8x8xf32, #tpu.memory_space<vmem>>, vector<8x8xf32>
    %c0_1 = arith.constant 0 : index
    %c0_2 = arith.constant 0 : index
    %1 = vector.load %arg2[%c0_1, %c0_2] : memref<1x512xf32, #tpu.memory_space<vmem>>, vector<1x512xf32>
    %c0_3 = arith.constant 0 : index
    %c0_4 = arith.constant 0 : index
    %2 = vector.load %arg4[%c0_3, %c0_4] : memref<1x512xf32, #tpu.memory_space<vmem>>, vector<1x512xf32>
    %3 = vector.extract_strided_slice %0 {offsets = [0, 0], sizes = [8, 1], strides = [1, 1]} : vector<8x8xf32> to vector<8x1xf32>
    %4 = vector.broadcast %3 : vector<8x1xf32> to vector<8x512xf32>
    %5 = vector.broadcast %1 : vector<1x512xf32> to vector<8x512xf32>
    %6 = arith.mulf %4, %5 : vector<8x512xf32>
    %7 = vector.broadcast %2 : vector<1x512xf32> to vector<8x512xf32>
    %8 = arith.addf %6, %7 : vector<8x512xf32>
    %c0_5 = arith.constant 0 : index
    %c0_6 = arith.constant 0 : index
    %c0_7 = arith.constant 0 : index
    %9 = vector.load %arg6[%c0_5, %c0_6, %c0_7] : memref<8x8x512xf32, #tpu.memory_space<vmem>>, vector<1x8x512xf32>
    %10 = vector.shape_cast %9 : vector<1x8x512xf32> to vector<8x512xf32>
    %11 = vector.shape_cast %8 : vector<8x512xf32> to vector<1x8x512xf32>
    tpu.vector_store %arg6[%c0_5, %c0_6, %c0_7], %11 {strides = array<i32>} : memref<8x8x512xf32, #tpu.memory_space<vmem>>, vector<1x8x512xf32>,
    %12 = vector.extract_strided_slice %0 {offsets = [0, 1], sizes = [8, 1], strides = [1, 1]} : vector<8x8xf32> to vector<8x1xf32>
    %13 = vector.broadcast %12 : vector<8x1xf32> to vector<8x512xf32>
    %14 = vector.broadcast %1 : vector<1x512xf32> to vector<8x512xf32>
    %15 = arith.mulf %13, %14 : vector<8x512xf32>
    %16 = vector.broadcast %2 : vector<1x512xf32> to vector<8x512xf32>
    %17 = arith.addf %15, %16 : vector<8x512xf32>
    %c1 = arith.constant 1 : index
    %c0_8 = arith.constant 0 : index
    %c0_9 = arith.constant 0 : index
    %18 = vector.load %arg6[%c1, %c0_8, %c0_9] : memref<8x8x512xf32, #tpu.memory_space<vmem>>, vector<1x8x512xf32>
    %19 = vector.shape_cast %18 : vector<1x8x512xf32> to vector<8x512xf32>
    %20 = vector.shape_cast %17 : vector<8x512xf32> to vector<1x8x512xf32>
    tpu.vector_store %arg6[%c1, %c0_8, %c0_9], %20 {strides = array<i32>} : memref<8x8x512xf32, #tpu.memory_space<vmem>>, vector<1x8x512xf32>,
    %21 = vector.extract_strided_slice %0 {offsets = [0, 2], sizes = [8, 1], strides = [1, 1]} : vector<8x8xf32> to vector<8x1xf32>
    %22 = vector.broadcast %21 : vector<8x1xf32> to vector<8x512xf32>
    %23 = vector.broadcast %1 : vector<1x512xf32> to vector<8x512xf32>
    %24 = arith.mulf %22, %23 : vector<8x512xf32>
    %25 = vector.broadcast %2 : vector<1x512xf32> to vector<8x512xf32>
    %26 = arith.addf %24, %25 : vector<8x512xf32>
    %c2 = arith.constant 2 : index
    %c0_10 = arith.constant 0 : index
    %c0_11 = arith.constant 0 : index
    %27 = vector.load %arg6[%c2, %c0_10, %c0_11] : memref<8x8x512xf32, #tpu.memory_space<vmem>>, vector<1x8x512xf32>
    %28 = vector.shape_cast %27 : vector<1x8x512xf32> to vector<8x512xf32>
    %29 = vector.shape_cast %26 : vector<8x512xf32> to vector<1x8x512xf32>
    tpu.vector_store %arg6[%c2, %c0_10, %c0_11], %29 {strides = array<i32>} : memref<8x8x512xf32, #tpu.memory_space<vmem>>, vector<1x8x512xf32>,
    %30 = vector.extract_strided_slice %0 {offsets = [0, 3], sizes = [8, 1], strides = [1, 1]} : vector<8x8xf32> to vector<8x1xf32>
    %31 = vector.broadcast %30 : vector<8x1xf32> to vector<8x512xf32>
    %32 = vector.broadcast %1 : vector<1x512xf32> to vector<8x512xf32>
    %33 = arith.mulf %31, %32 : vector<8x512xf32>
    %34 = vector.broadcast %2 : vector<1x512xf32> to vector<8x512xf32>
    %35 = arith.addf %33, %34 : vector<8x512xf32>
    %c3 = arith.constant 3 : index
    %c0_12 = arith.constant 0 : index
    %c0_13 = arith.constant 0 : index
    %36 = vector.load %arg6[%c3, %c0_12, %c0_13] : memref<8x8x512xf32, #tpu.memory_space<vmem>>, vector<1x8x512xf32>
    %37 = vector.shape_cast %36 : vector<1x8x512xf32> to vector<8x512xf32>
    %38 = vector.shape_cast %35 : vector<8x512xf32> to vector<1x8x512xf32>
    tpu.vector_store %arg6[%c3, %c0_12, %c0_13], %38 {strides = array<i32>} : memref<8x8x512xf32, #tpu.memory_space<vmem>>, vector<1x8x512xf32>,
    %39 = vector.extract_strided_slice %0 {offsets = [0, 4], sizes = [8, 1], strides = [1, 1]} : vector<8x8xf32> to vector<8x1xf32>
    %40 = vector.broadcast %39 : vector<8x1xf32> to vector<8x512xf32>
    %41 = vector.broadcast %1 : vector<1x512xf32> to vector<8x512xf32>
    %42 = arith.mulf %40, %41 : vector<8x512xf32>
    %43 = vector.broadcast %2 : vector<1x512xf32> to vector<8x512xf32>
    %44 = arith.addf %42, %43 : vector<8x512xf32>
    %c4 = arith.constant 4 : index
    %c0_14 = arith.constant 0 : index
    %c0_15 = arith.constant 0 : index
    %45 = vector.load %arg6[%c4, %c0_14, %c0_15] : memref<8x8x512xf32, #tpu.memory_space<vmem>>, vector<1x8x512xf32>
    %46 = vector.shape_cast %45 : vector<1x8x512xf32> to vector<8x512xf32>
    %47 = vector.shape_cast %44 : vector<8x512xf32> to vector<1x8x512xf32>
    tpu.vector_store %arg6[%c4, %c0_14, %c0_15], %47 {strides = array<i32>} : memref<8x8x512xf32, #tpu.memory_space<vmem>>, vector<1x8x512xf32>,
    %48 = vector.extract_strided_slice %0 {offsets = [0, 5], sizes = [8, 1], strides = [1, 1]} : vector<8x8xf32> to vector<8x1xf32>
    %49 = vector.broadcast %48 : vector<8x1xf32> to vector<8x512xf32>
    %50 = vector.broadcast %1 : vector<1x512xf32> to vector<8x512xf32>
    %51 = arith.mulf %49, %50 : vector<8x512xf32>
    %52 = vector.broadcast %2 : vector<1x512xf32> to vector<8x512xf32>
    %53 = arith.addf %51, %52 : vector<8x512xf32>
    %c5 = arith.constant 5 : index
    %c0_16 = arith.constant 0 : index
    %c0_17 = arith.constant 0 : index
    %54 = vector.load %arg6[%c5, %c0_16, %c0_17] : memref<8x8x512xf32, #tpu.memory_space<vmem>>, vector<1x8x512xf32>
    %55 = vector.shape_cast %54 : vector<1x8x512xf32> to vector<8x512xf32>
    %56 = vector.shape_cast %53 : vector<8x512xf32> to vector<1x8x512xf32>
    tpu.vector_store %arg6[%c5, %c0_16, %c0_17], %56 {strides = array<i32>} : memref<8x8x512xf32, #tpu.memory_space<vmem>>, vector<1x8x512xf32>,
    %57 = vector.extract_strided_slice %0 {offsets = [0, 6], sizes = [8, 1], strides = [1, 1]} : vector<8x8xf32> to vector<8x1xf32>
    %58 = vector.broadcast %57 : vector<8x1xf32> to vector<8x512xf32>
    %59 = vector.broadcast %1 : vector<1x512xf32> to vector<8x512xf32>
    %60 = arith.mulf %58, %59 : vector<8x512xf32>
    %61 = vector.broadcast %2 : vector<1x512xf32> to vector<8x512xf32>
    %62 = arith.addf %60, %61 : vector<8x512xf32>
    %c6 = arith.constant 6 : index
    %c0_18 = arith.constant 0 : index
    %c0_19 = arith.constant 0 : index
    %63 = vector.load %arg6[%c6, %c0_18, %c0_19] : memref<8x8x512xf32, #tpu.memory_space<vmem>>, vector<1x8x512xf32>
    %64 = vector.shape_cast %63 : vector<1x8x512xf32> to vector<8x512xf32>
    %65 = vector.shape_cast %62 : vector<8x512xf32> to vector<1x8x512xf32>
    tpu.vector_store %arg6[%c6, %c0_18, %c0_19], %65 {strides = array<i32>} : memref<8x8x512xf32, #tpu.memory_space<vmem>>, vector<1x8x512xf32>,
    %66 = vector.extract_strided_slice %0 {offsets = [0, 7], sizes = [8, 1], strides = [1, 1]} : vector<8x8xf32> to vector<8x1xf32>
    %67 = vector.broadcast %66 : vector<8x1xf32> to vector<8x512xf32>
    %68 = vector.broadcast %1 : vector<1x512xf32> to vector<8x512xf32>
    %69 = arith.mulf %67, %68 : vector<8x512xf32>
    %70 = vector.broadcast %2 : vector<1x512xf32> to vector<8x512xf32>
    %71 = arith.addf %69, %70 : vector<8x512xf32>
    %c7 = arith.constant 7 : index
    %c0_20 = arith.constant 0 : index
    %c0_21 = arith.constant 0 : index
    %72 = vector.load %arg6[%c7, %c0_20, %c0_21] : memref<8x8x512xf32, #tpu.memory_space<vmem>>, vector<1x8x512xf32>
    %73 = vector.shape_cast %72 : vector<1x8x512xf32> to vector<8x512xf32>
    %74 = vector.shape_cast %71 : vector<8x512xf32> to vector<1x8x512xf32>
    tpu.vector_store %arg6[%c7, %c0_20, %c0_21], %74 {strides = array<i32>} : memref<8x8x512xf32, #tpu.memory_space<vmem>>, vector<1x8x512xf32>,
    %c0_22 = arith.constant 0 : index
    %c0_23 = arith.constant 0 : index
    %75 = vector.load %arg3[%c0_22, %c0_23] : memref<128x512xbf16, #tpu.memory_space<vmem>>, vector<128x512xbf16>
    %cst = arith.constant 0.000000e+00 : f32
    %76 = vector.broadcast %cst : f32 to vector<8x128xf32>
    %cst_24 = arith.constant 0.000000e+00 : f32
    %77 = vector.broadcast %cst_24 : f32 to vector<8x128xf32>
    %c0_25 = arith.constant 0 : index
    %c0_26 = arith.constant 0 : index
    %c0_27 = arith.constant 0 : index
    %78 = vector.load %arg6[%c0_25, %c0_26, %c0_27] : memref<8x8x512xf32, #tpu.memory_space<vmem>>, vector<1x8x512xf32>
    %79 = vector.shape_cast %78 : vector<1x8x512xf32> to vector<8x512xf32>
    %80 = arith.truncf %76 : vector<8x128xf32> to vector<8x128xbf16>
    %cst_28 = arith.constant dense<0.000000e+00> : vector<8x512xf32>
    %81 = tpu.matmul %80, %75, %cst_28 {dimension_numbers = #tpu.dot_dimension_numbers<[1], [0], [0], [1], [0, 0, 1, 1], [], []>} : vector<8x128xbf16>, vector<128x512xbf16>, vector<8x512xf32> -> vector<8x512xf32>
    %82 = arith.addf %79, %81 : vector<8x512xf32>
    %83 = vector.extract_strided_slice %82 {offsets = [0, 0], sizes = [8, 384], strides = [1, 1]} : vector<8x512xf32> to vector<8x384xf32>
    %cst_29 = arith.constant 5.000000e-01 : f32
    %84 = vector.broadcast %cst_29 : f32 to vector<8x384xf32>
    %85 = arith.mulf %84, %83 : vector<8x384xf32>
    %86 = math.tanh %85 : vector<8x384xf32>
    %cst_30 = arith.constant 1.000000e+00 : f32
    %87 = vector.broadcast %cst_30 : f32 to vector<8x384xf32>
    %88 = arith.addf %86, %87 : vector<8x384xf32>
    %cst_31 = arith.constant 5.000000e-01 : f32
    %89 = vector.broadcast %cst_31 : f32 to vector<8x384xf32>
    %90 = arith.mulf %89, %88 : vector<8x384xf32>
    %91 = vector.extract_strided_slice %90 {offsets = [0, 0], sizes = [8, 128], strides = [1, 1]} : vector<8x384xf32> to vector<8x128xf32>
    %92 = vector.extract_strided_slice %90 {offsets = [0, 128], sizes = [8, 128], strides = [1, 1]} : vector<8x384xf32> to vector<8x128xf32>
    %93 = vector.extract_strided_slice %90 {offsets = [0, 256], sizes = [8, 128], strides = [1, 1]} : vector<8x384xf32> to vector<8x128xf32>
    %94 = vector.extract_strided_slice %82 {offsets = [0, 384], sizes = [8, 128], strides = [1, 1]} : vector<8x512xf32> to vector<8x128xf32>
    %95 = math.tanh %94 : vector<8x128xf32>
    %96 = arith.mulf %92, %77 : vector<8x128xf32>
    %97 = arith.mulf %91, %95 : vector<8x128xf32>
    %98 = arith.addf %96, %97 : vector<8x128xf32>
    %99 = math.tanh %98 : vector<8x128xf32>
    %100 = arith.mulf %93, %99 : vector<8x128xf32>
    %c1_32 = arith.constant 1 : index
    %c0_33 = arith.constant 0 : index
    %c0_34 = arith.constant 0 : index
    %101 = vector.load %arg6[%c1_32, %c0_33, %c0_34] : memref<8x8x512xf32, #tpu.memory_space<vmem>>, vector<1x8x512xf32>
    %102 = vector.shape_cast %101 : vector<1x8x512xf32> to vector<8x512xf32>
    %103 = arith.truncf %100 : vector<8x128xf32> to vector<8x128xbf16>
    %cst_35 = arith.constant dense<0.000000e+00> : vector<8x512xf32>
    %104 = tpu.matmul %103, %75, %cst_35 {dimension_numbers = #tpu.dot_dimension_numbers<[1], [0], [0], [1], [0, 0, 1, 1], [], []>} : vector<8x128xbf16>, vector<128x512xbf16>, vector<8x512xf32> -> vector<8x512xf32>
    %105 = arith.addf %102, %104 : vector<8x512xf32>
    %106 = vector.extract_strided_slice %105 {offsets = [0, 0], sizes = [8, 384], strides = [1, 1]} : vector<8x512xf32> to vector<8x384xf32>
    %cst_36 = arith.constant 5.000000e-01 : f32
    %107 = vector.broadcast %cst_36 : f32 to vector<8x384xf32>
    %108 = arith.mulf %107, %106 : vector<8x384xf32>
    %109 = math.tanh %108 : vector<8x384xf32>
    %cst_37 = arith.constant 1.000000e+00 : f32
    %110 = vector.broadcast %cst_37 : f32 to vector<8x384xf32>
    %111 = arith.addf %109, %110 : vector<8x384xf32>
    %cst_38 = arith.constant 5.000000e-01 : f32
    %112 = vector.broadcast %cst_38 : f32 to vector<8x384xf32>
    %113 = arith.mulf %112, %111 : vector<8x384xf32>
    %114 = vector.extract_strided_slice %113 {offsets = [0, 0], sizes = [8, 128], strides = [1, 1]} : vector<8x384xf32> to vector<8x128xf32>
    %115 = vector.extract_strided_slice %113 {offsets = [0, 128], sizes = [8, 128], strides = [1, 1]} : vector<8x384xf32> to vector<8x128xf32>
    %116 = vector.extract_strided_slice %113 {offsets = [0, 256], sizes = [8, 128], strides = [1, 1]} : vector<8x384xf32> to vector<8x128xf32>
    %117 = vector.extract_strided_slice %105 {offsets = [0, 384], sizes = [8, 128], strides = [1, 1]} : vector<8x512xf32> to vector<8x128xf32>
    %118 = math.tanh %117 : vector<8x128xf32>
    %119 = arith.mulf %115, %98 : vector<8x128xf32>
    %120 = arith.mulf %114, %118 : vector<8x128xf32>
    %121 = arith.addf %119, %120 : vector<8x128xf32>
    %122 = math.tanh %121 : vector<8x128xf32>
    %123 = arith.mulf %116, %122 : vector<8x128xf32>
    %c2_39 = arith.constant 2 : index
    %c0_40 = arith.constant 0 : index
    %c0_41 = arith.constant 0 : index
    %124 = vector.load %arg6[%c2_39, %c0_40, %c0_41] : memref<8x8x512xf32, #tpu.memory_space<vmem>>, vector<1x8x512xf32>
    %125 = vector.shape_cast %124 : vector<1x8x512xf32> to vector<8x512xf32>
    %126 = arith.truncf %123 : vector<8x128xf32> to vector<8x128xbf16>
    %cst_42 = arith.constant dense<0.000000e+00> : vector<8x512xf32>
    %127 = tpu.matmul %126, %75, %cst_42 {dimension_numbers = #tpu.dot_dimension_numbers<[1], [0], [0], [1], [0, 0, 1, 1], [], []>} : vector<8x128xbf16>, vector<128x512xbf16>, vector<8x512xf32> -> vector<8x512xf32>
    %128 = arith.addf %125, %127 : vector<8x512xf32>
    %129 = vector.extract_strided_slice %128 {offsets = [0, 0], sizes = [8, 384], strides = [1, 1]} : vector<8x512xf32> to vector<8x384xf32>
    %cst_43 = arith.constant 5.000000e-01 : f32
    %130 = vector.broadcast %cst_43 : f32 to vector<8x384xf32>
    %131 = arith.mulf %130, %129 : vector<8x384xf32>
    %132 = math.tanh %131 : vector<8x384xf32>
    %cst_44 = arith.constant 1.000000e+00 : f32
    %133 = vector.broadcast %cst_44 : f32 to vector<8x384xf32>
    %134 = arith.addf %132, %133 : vector<8x384xf32>
    %cst_45 = arith.constant 5.000000e-01 : f32
    %135 = vector.broadcast %cst_45 : f32 to vector<8x384xf32>
    %136 = arith.mulf %135, %134 : vector<8x384xf32>
    %137 = vector.extract_strided_slice %136 {offsets = [0, 0], sizes = [8, 128], strides = [1, 1]} : vector<8x384xf32> to vector<8x128xf32>
    %138 = vector.extract_strided_slice %136 {offsets = [0, 128], sizes = [8, 128], strides = [1, 1]} : vector<8x384xf32> to vector<8x128xf32>
    %139 = vector.extract_strided_slice %136 {offsets = [0, 256], sizes = [8, 128], strides = [1, 1]} : vector<8x384xf32> to vector<8x128xf32>
    %140 = vector.extract_strided_slice %128 {offsets = [0, 384], sizes = [8, 128], strides = [1, 1]} : vector<8x512xf32> to vector<8x128xf32>
    %141 = math.tanh %140 : vector<8x128xf32>
    %142 = arith.mulf %138, %121 : vector<8x128xf32>
    %143 = arith.mulf %137, %141 : vector<8x128xf32>
    %144 = arith.addf %142, %143 : vector<8x128xf32>
    %145 = math.tanh %144 : vector<8x128xf32>
    %146 = arith.mulf %139, %145 : vector<8x128xf32>
    %c3_46 = arith.constant 3 : index
    %c0_47 = arith.constant 0 : index
    %c0_48 = arith.constant 0 : index
    %147 = vector.load %arg6[%c3_46, %c0_47, %c0_48] : memref<8x8x512xf32, #tpu.memory_space<vmem>>, vector<1x8x512xf32>
    %148 = vector.shape_cast %147 : vector<1x8x512xf32> to vector<8x512xf32>
    %149 = arith.truncf %146 : vector<8x128xf32> to vector<8x128xbf16>
    %cst_49 = arith.constant dense<0.000000e+00> : vector<8x512xf32>
    %150 = tpu.matmul %149, %75, %cst_49 {dimension_numbers = #tpu.dot_dimension_numbers<[1], [0], [0], [1], [0, 0, 1, 1], [], []>} : vector<8x128xbf16>, vector<128x512xbf16>, vector<8x512xf32> -> vector<8x512xf32>
    %151 = arith.addf %148, %150 : vector<8x512xf32>
    %152 = vector.extract_strided_slice %151 {offsets = [0, 0], sizes = [8, 384], strides = [1, 1]} : vector<8x512xf32> to vector<8x384xf32>
    %cst_50 = arith.constant 5.000000e-01 : f32
    %153 = vector.broadcast %cst_50 : f32 to vector<8x384xf32>
    %154 = arith.mulf %153, %152 : vector<8x384xf32>
    %155 = math.tanh %154 : vector<8x384xf32>
    %cst_51 = arith.constant 1.000000e+00 : f32
    %156 = vector.broadcast %cst_51 : f32 to vector<8x384xf32>
    %157 = arith.addf %155, %156 : vector<8x384xf32>
    %cst_52 = arith.constant 5.000000e-01 : f32
    %158 = vector.broadcast %cst_52 : f32 to vector<8x384xf32>
    %159 = arith.mulf %158, %157 : vector<8x384xf32>
    %160 = vector.extract_strided_slice %159 {offsets = [0, 0], sizes = [8, 128], strides = [1, 1]} : vector<8x384xf32> to vector<8x128xf32>
    %161 = vector.extract_strided_slice %159 {offsets = [0, 128], sizes = [8, 128], strides = [1, 1]} : vector<8x384xf32> to vector<8x128xf32>
    %162 = vector.extract_strided_slice %159 {offsets = [0, 256], sizes = [8, 128], strides = [1, 1]} : vector<8x384xf32> to vector<8x128xf32>
    %163 = vector.extract_strided_slice %151 {offsets = [0, 384], sizes = [8, 128], strides = [1, 1]} : vector<8x512xf32> to vector<8x128xf32>
    %164 = math.tanh %163 : vector<8x128xf32>
    %165 = arith.mulf %161, %144 : vector<8x128xf32>
    %166 = arith.mulf %160, %164 : vector<8x128xf32>
    %167 = arith.addf %165, %166 : vector<8x128xf32>
    %168 = math.tanh %167 : vector<8x128xf32>
    %169 = arith.mulf %162, %168 : vector<8x128xf32>
    %c4_53 = arith.constant 4 : index
    %c0_54 = arith.constant 0 : index
    %c0_55 = arith.constant 0 : index
    %170 = vector.load %arg6[%c4_53, %c0_54, %c0_55] : memref<8x8x512xf32, #tpu.memory_space<vmem>>, vector<1x8x512xf32>
    %171 = vector.shape_cast %170 : vector<1x8x512xf32> to vector<8x512xf32>
    %172 = arith.truncf %169 : vector<8x128xf32> to vector<8x128xbf16>
    %cst_56 = arith.constant dense<0.000000e+00> : vector<8x512xf32>
    %173 = tpu.matmul %172, %75, %cst_56 {dimension_numbers = #tpu.dot_dimension_numbers<[1], [0], [0], [1], [0, 0, 1, 1], [], []>} : vector<8x128xbf16>, vector<128x512xbf16>, vector<8x512xf32> -> vector<8x512xf32>
    %174 = arith.addf %171, %173 : vector<8x512xf32>
    %175 = vector.extract_strided_slice %174 {offsets = [0, 0], sizes = [8, 384], strides = [1, 1]} : vector<8x512xf32> to vector<8x384xf32>
    %cst_57 = arith.constant 5.000000e-01 : f32
    %176 = vector.broadcast %cst_57 : f32 to vector<8x384xf32>
    %177 = arith.mulf %176, %175 : vector<8x384xf32>
    %178 = math.tanh %177 : vector<8x384xf32>
    %cst_58 = arith.constant 1.000000e+00 : f32
    %179 = vector.broadcast %cst_58 : f32 to vector<8x384xf32>
    %180 = arith.addf %178, %179 : vector<8x384xf32>
    %cst_59 = arith.constant 5.000000e-01 : f32
    %181 = vector.broadcast %cst_59 : f32 to vector<8x384xf32>
    %182 = arith.mulf %181, %180 : vector<8x384xf32>
    %183 = vector.extract_strided_slice %182 {offsets = [0, 0], sizes = [8, 128], strides = [1, 1]} : vector<8x384xf32> to vector<8x128xf32>
    %184 = vector.extract_strided_slice %182 {offsets = [0, 128], sizes = [8, 128], strides = [1, 1]} : vector<8x384xf32> to vector<8x128xf32>
    %185 = vector.extract_strided_slice %182 {offsets = [0, 256], sizes = [8, 128], strides = [1, 1]} : vector<8x384xf32> to vector<8x128xf32>
    %186 = vector.extract_strided_slice %174 {offsets = [0, 384], sizes = [8, 128], strides = [1, 1]} : vector<8x512xf32> to vector<8x128xf32>
    %187 = math.tanh %186 : vector<8x128xf32>
    %188 = arith.mulf %184, %167 : vector<8x128xf32>
    %189 = arith.mulf %183, %187 : vector<8x128xf32>
    %190 = arith.addf %188, %189 : vector<8x128xf32>
    %191 = math.tanh %190 : vector<8x128xf32>
    %192 = arith.mulf %185, %191 : vector<8x128xf32>
    %c5_60 = arith.constant 5 : index
    %c0_61 = arith.constant 0 : index
    %c0_62 = arith.constant 0 : index
    %193 = vector.load %arg6[%c5_60, %c0_61, %c0_62] : memref<8x8x512xf32, #tpu.memory_space<vmem>>, vector<1x8x512xf32>
    %194 = vector.shape_cast %193 : vector<1x8x512xf32> to vector<8x512xf32>
    %195 = arith.truncf %192 : vector<8x128xf32> to vector<8x128xbf16>
    %cst_63 = arith.constant dense<0.000000e+00> : vector<8x512xf32>
    %196 = tpu.matmul %195, %75, %cst_63 {dimension_numbers = #tpu.dot_dimension_numbers<[1], [0], [0], [1], [0, 0, 1, 1], [], []>} : vector<8x128xbf16>, vector<128x512xbf16>, vector<8x512xf32> -> vector<8x512xf32>
    %197 = arith.addf %194, %196 : vector<8x512xf32>
    %198 = vector.extract_strided_slice %197 {offsets = [0, 0], sizes = [8, 384], strides = [1, 1]} : vector<8x512xf32> to vector<8x384xf32>
    %cst_64 = arith.constant 5.000000e-01 : f32
    %199 = vector.broadcast %cst_64 : f32 to vector<8x384xf32>
    %200 = arith.mulf %199, %198 : vector<8x384xf32>
    %201 = math.tanh %200 : vector<8x384xf32>
    %cst_65 = arith.constant 1.000000e+00 : f32
    %202 = vector.broadcast %cst_65 : f32 to vector<8x384xf32>
    %203 = arith.addf %201, %202 : vector<8x384xf32>
    %cst_66 = arith.constant 5.000000e-01 : f32
    %204 = vector.broadcast %cst_66 : f32 to vector<8x384xf32>
    %205 = arith.mulf %204, %203 : vector<8x384xf32>
    %206 = vector.extract_strided_slice %205 {offsets = [0, 0], sizes = [8, 128], strides = [1, 1]} : vector<8x384xf32> to vector<8x128xf32>
    %207 = vector.extract_strided_slice %205 {offsets = [0, 128], sizes = [8, 128], strides = [1, 1]} : vector<8x384xf32> to vector<8x128xf32>
    %208 = vector.extract_strided_slice %205 {offsets = [0, 256], sizes = [8, 128], strides = [1, 1]} : vector<8x384xf32> to vector<8x128xf32>
    %209 = vector.extract_strided_slice %197 {offsets = [0, 384], sizes = [8, 128], strides = [1, 1]} : vector<8x512xf32> to vector<8x128xf32>
    %210 = math.tanh %209 : vector<8x128xf32>
    %211 = arith.mulf %207, %190 : vector<8x128xf32>
    %212 = arith.mulf %206, %210 : vector<8x128xf32>
    %213 = arith.addf %211, %212 : vector<8x128xf32>
    %214 = math.tanh %213 : vector<8x128xf32>
    %215 = arith.mulf %208, %214 : vector<8x128xf32>
    %c6_67 = arith.constant 6 : index
    %c0_68 = arith.constant 0 : index
    %c0_69 = arith.constant 0 : index
    %216 = vector.load %arg6[%c6_67, %c0_68, %c0_69] : memref<8x8x512xf32, #tpu.memory_space<vmem>>, vector<1x8x512xf32>
    %217 = vector.shape_cast %216 : vector<1x8x512xf32> to vector<8x512xf32>
    %218 = arith.truncf %215 : vector<8x128xf32> to vector<8x128xbf16>
    %cst_70 = arith.constant dense<0.000000e+00> : vector<8x512xf32>
    %219 = tpu.matmul %218, %75, %cst_70 {dimension_numbers = #tpu.dot_dimension_numbers<[1], [0], [0], [1], [0, 0, 1, 1], [], []>} : vector<8x128xbf16>, vector<128x512xbf16>, vector<8x512xf32> -> vector<8x512xf32>
    %220 = arith.addf %217, %219 : vector<8x512xf32>
    %221 = vector.extract_strided_slice %220 {offsets = [0, 0], sizes = [8, 384], strides = [1, 1]} : vector<8x512xf32> to vector<8x384xf32>
    %cst_71 = arith.constant 5.000000e-01 : f32
    %222 = vector.broadcast %cst_71 : f32 to vector<8x384xf32>
    %223 = arith.mulf %222, %221 : vector<8x384xf32>
    %224 = math.tanh %223 : vector<8x384xf32>
    %cst_72 = arith.constant 1.000000e+00 : f32
    %225 = vector.broadcast %cst_72 : f32 to vector<8x384xf32>
    %226 = arith.addf %224, %225 : vector<8x384xf32>
    %cst_73 = arith.constant 5.000000e-01 : f32
    %227 = vector.broadcast %cst_73 : f32 to vector<8x384xf32>
    %228 = arith.mulf %227, %226 : vector<8x384xf32>
    %229 = vector.extract_strided_slice %228 {offsets = [0, 0], sizes = [8, 128], strides = [1, 1]} : vector<8x384xf32> to vector<8x128xf32>
    %230 = vector.extract_strided_slice %228 {offsets = [0, 128], sizes = [8, 128], strides = [1, 1]} : vector<8x384xf32> to vector<8x128xf32>
    %231 = vector.extract_strided_slice %228 {offsets = [0, 256], sizes = [8, 128], strides = [1, 1]} : vector<8x384xf32> to vector<8x128xf32>
    %232 = vector.extract_strided_slice %220 {offsets = [0, 384], sizes = [8, 128], strides = [1, 1]} : vector<8x512xf32> to vector<8x128xf32>
    %233 = math.tanh %232 : vector<8x128xf32>
    %234 = arith.mulf %230, %213 : vector<8x128xf32>
    %235 = arith.mulf %229, %233 : vector<8x128xf32>
    %236 = arith.addf %234, %235 : vector<8x128xf32>
    %237 = math.tanh %236 : vector<8x128xf32>
    %238 = arith.mulf %231, %237 : vector<8x128xf32>
    %c7_74 = arith.constant 7 : index
    %c0_75 = arith.constant 0 : index
    %c0_76 = arith.constant 0 : index
    %239 = vector.load %arg6[%c7_74, %c0_75, %c0_76] : memref<8x8x512xf32, #tpu.memory_space<vmem>>, vector<1x8x512xf32>
    %240 = vector.shape_cast %239 : vector<1x8x512xf32> to vector<8x512xf32>
    %241 = arith.truncf %238 : vector<8x128xf32> to vector<8x128xbf16>
    %cst_77 = arith.constant dense<0.000000e+00> : vector<8x512xf32>
    %242 = tpu.matmul %241, %75, %cst_77 {dimension_numbers = #tpu.dot_dimension_numbers<[1], [0], [0], [1], [0, 0, 1, 1], [], []>} : vector<8x128xbf16>, vector<128x512xbf16>, vector<8x512xf32> -> vector<8x512xf32>
    %243 = arith.addf %240, %242 : vector<8x512xf32>
    %244 = vector.extract_strided_slice %243 {offsets = [0, 0], sizes = [8, 384], strides = [1, 1]} : vector<8x512xf32> to vector<8x384xf32>
    %cst_78 = arith.constant 5.000000e-01 : f32
    %245 = vector.broadcast %cst_78 : f32 to vector<8x384xf32>
    %246 = arith.mulf %245, %244 : vector<8x384xf32>
    %247 = math.tanh %246 : vector<8x384xf32>
    %cst_79 = arith.constant 1.000000e+00 : f32
    %248 = vector.broadcast %cst_79 : f32 to vector<8x384xf32>
    %249 = arith.addf %247, %248 : vector<8x384xf32>
    %cst_80 = arith.constant 5.000000e-01 : f32
    %250 = vector.broadcast %cst_80 : f32 to vector<8x384xf32>
    %251 = arith.mulf %250, %249 : vector<8x384xf32>
    %252 = vector.extract_strided_slice %251 {offsets = [0, 0], sizes = [8, 128], strides = [1, 1]} : vector<8x384xf32> to vector<8x128xf32>
    %253 = vector.extract_strided_slice %251 {offsets = [0, 128], sizes = [8, 128], strides = [1, 1]} : vector<8x384xf32> to vector<8x128xf32>
    %254 = vector.extract_strided_slice %251 {offsets = [0, 256], sizes = [8, 128], strides = [1, 1]} : vector<8x384xf32> to vector<8x128xf32>
    %255 = vector.extract_strided_slice %243 {offsets = [0, 384], sizes = [8, 128], strides = [1, 1]} : vector<8x512xf32> to vector<8x128xf32>
    %256 = math.tanh %255 : vector<8x128xf32>
    %257 = arith.mulf %253, %236 : vector<8x128xf32>
    %258 = arith.mulf %252, %256 : vector<8x128xf32>
    %259 = arith.addf %257, %258 : vector<8x128xf32>
    %260 = math.tanh %259 : vector<8x128xf32>
    %261 = arith.mulf %254, %260 : vector<8x128xf32>
    %c0_81 = arith.constant 0 : index
    %c0_82 = arith.constant 0 : index
    %262 = vector.load %arg5[%c0_81, %c0_82] : memref<8x128xf32, #tpu.memory_space<vmem>>, vector<8x128xf32>
    tpu.vector_store %arg5[%c0_81, %c0_82], %261 {strides = array<i32>} : memref<8x128xf32, #tpu.memory_space<vmem>>, vector<8x128xf32>,
    return
  }
  func.func @transform_0(%arg0: i32) -> (i32, i32) {
    %c0_i32 = arith.constant 0 : i32
    %c0_i32_0 = arith.constant 0 : i32
    return %arg0, %c0_i32 : i32, i32
  }
  func.func @transform_1(%arg0: i32) -> (i32, i32) {
    %c0_i32 = arith.constant 0 : i32
    %c0_i32_0 = arith.constant 0 : i32
    %c0_i32_1 = arith.constant 0 : i32
    return %c0_i32, %c0_i32_0 : i32, i32
  }
  func.func @transform_2(%arg0: i32) -> (i32, i32) {
    %c0_i32 = arith.constant 0 : i32
    %c0_i32_0 = arith.constant 0 : i32
    %c0_i32_1 = arith.constant 0 : i32
    return %c0_i32, %c0_i32_0 : i32, i32
  }
  func.func @transform_3(%arg0: i32) -> (i32, i32) {
    %c0_i32 = arith.constant 0 : i32
    %c0_i32_0 = arith.constant 0 : i32
    %c0_i32_1 = arith.constant 0 : i32
    return %c0_i32, %c0_i32_0 : i32, i32
  }
  func.func @transform_4(%arg0: i32) -> (i32, i32) {
    %c0_i32 = arith.constant 0 : i32
    %c0_i32_0 = arith.constant 0 : i32
    return %arg0, %c0_i32 : i32, i32
  }
}

</mosaic_0001>

<llo_original>
// kernel: tpu_custom_call.1
$region0: #{tpu_custom_call.1}
  #allocation0 [shape = 'u32[]', space=smem, size = 0x4, offset = 0x4, fixed_abs, tag = 'smem constant byte address 0x4 - core index']
  #allocation1 [shape = 'u32[144,128]{1,0:T(1,128)}', space=vmem, size = 0x12000, scoped, tag = 'internal scratch']
  #allocation2 [shape = 'f32[8,8,512]{2,1,0:T(8,128)}', space=vmem, size = 0x20000, scoped, tag = 'scratch operand']
  %s0 = inlined_call_operand.vmem [shape: f32[16,8], index: 0, kind: input, shape index: {}]
  %s1 = inlined_call_operand.vmem [shape: f32[1,512], index: 1, kind: input, shape index: {}]
  %s2 = inlined_call_operand.hbm [shape: bf16[128,512], index: 2, kind: input, shape index: {}]
  %s3 = inlined_call_operand.vmem [shape: f32[1,512], index: 3, kind: input, shape index: {}]
  %s4 = inlined_call_operand.hbm [shape: f32[16,128], index: 4, kind: output, shape index: {}]
  %s5 = sld [smem:[#allocation0]]
  $region53: #{tpu_custom_call.1} parent=0
    _
  %s7 = ssub.s32 1, %s5
  %s8 = scalar_select 0, %s7, %s5
  $region1: #{tpu_custom_call.1} parent=0
    #allocation3 [shape = 'u8[131072]{0}', space=vmem, size = 0x20000, scoped, tag = 'input window, operand 2, single buffered']
    #allocation4 [shape = 's32[2]{0}', space=sflag, size = 0x8, scoped, tag = 'scoped memory for tpu_custom_call.1']
    #allocation5 [shape = 's32[2]{0}', space=sflag, size = 0x8, scoped, tag = 'scoped memory for tpu_custom_call.1']
    #allocation6 [shape = 'u8[8192]{0}', space=vmem, size = 0x2000, scoped, tag = 'output window, operand 0']
    %9 = vsyncpa [#allocation4], 0
    %10 = vsyncpa [#allocation5], 0
    %s11 = scalar_lea.sflag [#allocation5], 1
    %12 = vsyncpa %s11, 0
    loop: start=0, step=1, limit=4
    $region2: #{tpu_custom_call.1} parent=1 // loop_pre_header
      _
    $region3: #{tpu_custom_call.1} parent=1 // loop_header
      %s14 = sphi 0, %s18
      %p15 = scmp.ge.s32.totalorder %s14, 4
      %s24 = sphi 0, %s26
      %s27 = sphi 0, %s24
      %s28 = sphi 0, %s27
      %s44 = sphi 0, %s28
      %s48 = sphi 0, %s48
      %s50 = sphi 0, %s48
      %s51 = sphi 0, %s50
      %s65 = sphi 0, %s51
      %s69 = sphi 0, %s69
      %s71 = sphi 0, %s69
      %s72 = sphi 0, %s71
      %s86 = sphi 0, %s72
      %s90 = sphi 0, %s90
      %s92 = sphi 0, %s90
      %s93 = sphi 0, %s92
      %s107 = sphi 0, %s93
      %s113 = sphi 0, %s115
      %s116 = sphi 0, %s113
      %s117 = sphi 0, %s116
      %s133 = sphi 0, %s117
    $region4: #{tpu_custom_call.1} parent=1 // loop_header_branch
      %17 = sbr.rel (%p15) target = $region8
    $region5: #{tpu_custom_call.1} parent=1 // loop_body
      %s19 = ssub.s32 %s14, 1
      %s20 = ssub.s32 %s14, 2
      %s21 = sadd.s32 %s14, 1
      %s22 = ssub.s32 %s14, %s21
      %p23 = scmp.eq.s32.totalorder %s22, 0
      %s25 = sadd.s32 %s24, 1
      %s26 = scalar_select %p23, %s24, %s25
      %p29 = pneg %p23
      %p30 = scmp.eq.s32.totalorder %s14, 1
      %p31 = por %p29, %p30
      %p32 = scmp.ne.s32.totalorder %s24, %s27
      %p33 = scmp.eq.s32.totalorder %s14, 0
      %p34 = por %p32, %p33
      %p35 = scmp.ne.s32.totalorder %s24, %s27
      %p36 = scmp.eq.s32.totalorder %s19, 1
      %p37 = por %p35, %p36
      %p38 = scmp.ne.s32.totalorder %s27, %s28
      %p39 = scmp.eq.s32.totalorder %s19, 0
      %p40 = por %p38, %p39
      %p41 = scmp.ne.s32.totalorder %s27, %s28
      %p42 = scmp.eq.s32.totalorder %s20, 1
      %p43 = por %p41, %p42
      %p45 = scmp.ne.s32.totalorder %s28, %s44
      %p46 = scmp.eq.s32.totalorder %s20, 0
      %p47 = por %p45, %p46
      %s49 = sadd.s32 %s48, 1
      %p52 = scmp.eq.s32.totalorder %s14, 1
      %p53 = scmp.ne.s32.totalorder %s48, %s50
      %p54 = scmp.eq.s32.totalorder %s14, 0
      %p55 = por %p53, %p54
      %p56 = scmp.ne.s32.totalorder %s48, %s50
      %p57 = scmp.eq.s32.totalorder %s19, 1
      %p58 = por %p56, %p57
      %p59 = scmp.ne.s32.totalorder %s50, %s51
      %p60 = scmp.eq.s32.totalorder %s19, 0
      %p61 = por %p59, %p60
      %p62 = scmp.ne.s32.totalorder %s50, %s51
      %p63 = scmp.eq.s32.totalorder %s20, 1
      %p64 = por %p62, %p63
      %p66 = scmp.ne.s32.totalorder %s51, %s65
      %p67 = scmp.eq.s32.totalorder %s20, 0
      %p68 = por %p66, %p67
      %s70 = sadd.s32 %s69, 1
      %p73 = scmp.eq.s32.totalorder %s14, 1
      %p74 = scmp.ne.s32.totalorder %s69, %s71
      %p75 = scmp.eq.s32.totalorder %s14, 0
      %p76 = por %p74, %p75
      %p77 = scmp.ne.s32.totalorder %s69, %s71
      %p78 = scmp.eq.s32.totalorder %s19, 1
      %p79 = por %p77, %p78
      %p80 = scmp.ne.s32.totalorder %s71, %s72
      %p81 = scmp.eq.s32.totalorder %s19, 0
      %p82 = por %p80, %p81
      %p83 = scmp.ne.s32.totalorder %s71, %s72
      %p84 = scmp.eq.s32.totalorder %s20, 1
      %p85 = por %p83, %p84
      %p87 = scmp.ne.s32.totalorder %s72, %s86
      %p88 = scmp.eq.s32.totalorder %s20, 0
      %p89 = por %p87, %p88
      %s91 = sadd.s32 %s90, 1
      %p94 = scmp.eq.s32.totalorder %s14, 1
      %p95 = scmp.ne.s32.totalorder %s90, %s92
      %p96 = scmp.eq.s32.totalorder %s14, 0
      %p97 = por %p95, %p96
      %p98 = scmp.ne.s32.totalorder %s90, %s92
      %p99 = scmp.eq.s32.totalorder %s19, 1
      %p100 = por %p98, %p99
      %p101 = scmp.ne.s32.totalorder %s92, %s93
      %p102 = scmp.eq.s32.totalorder %s19, 0
      %p103 = por %p101, %p102
      %p104 = scmp.ne.s32.totalorder %s92, %s93
      %p105 = scmp.eq.s32.totalorder %s20, 1
      %p106 = por %p104, %p105
      %p108 = scmp.ne.s32.totalorder %s93, %s107
      %p109 = scmp.eq.s32.totalorder %s20, 0
      %p110 = por %p108, %p109
      %s111 = ssub.s32 %s14, %s21
      %p112 = scmp.eq.s32.totalorder %s111, 0
      %s114 = sadd.s32 %s113, 1
      %s115 = scalar_select %p112, %s113, %s114
      %p118 = pneg %p112
      %p119 = scmp.eq.s32.totalorder %s14, 1
      %p120 = por %p118, %p119
      %p121 = scmp.ne.s32.totalorder %s113, %s116
      %p122 = scmp.eq.s32.totalorder %s14, 0
      %p123 = por %p121, %p122
      %p124 = scmp.ne.s32.totalorder %s113, %s116
      %p125 = scmp.eq.s32.totalorder %s19, 1
      %p126 = por %p124, %p125
      %p127 = scmp.ne.s32.totalorder %s116, %s117
      %p128 = scmp.eq.s32.totalorder %s19, 0
      %p129 = por %p127, %p128
      %p130 = scmp.ne.s32.totalorder %s116, %s117
      %p131 = scmp.eq.s32.totalorder %s20, 1
      %p132 = por %p130, %p131
      %p134 = scmp.ne.s32.totalorder %s117, %s133
      %p135 = scmp.eq.s32.totalorder %s20, 0
      %p136 = por %p134, %p135
      %p137 = scmp.le.s32.totalorder 1, %s14
      %p138 = scmp.lt.s32.totalorder %s14, 3
      %p139 = pnand %p137, %p138
      %p140 = pneg %p139
      // Predicated region
      $region9: #{tpu_custom_call.1} parent=5 // pred_check
        _
      $region10: #{tpu_custom_call.1} parent=5 // pred_check_branch
        %142 = sbr.rel (%p139) target = $region12
      $region11: #{tpu_custom_call.1} parent=5 // pred_region
        %s143 = ssub.s32 %s14, 1
        // Predicated region
        $region13: #{tpu_custom_call.1} parent=11 // pred_check
          %p144 = pneg %p61
        $region14: #{tpu_custom_call.1} parent=11 // pred_check_branch
          %146 = sbr.rel (%p144) target = $region16
        $region15: #{tpu_custom_call.1} parent=11 // pred_region
          _
        $region16: #{tpu_custom_call.1} parent=11 // pred_fallthru
          _
        // Predicated region
        $region17: #{tpu_custom_call.1} parent=11 // pred_check
          %p147 = pneg %p82
        $region18: #{tpu_custom_call.1} parent=11 // pred_check_branch
          %149 = sbr.rel (%p147) target = $region20
        $region19: #{tpu_custom_call.1} parent=11 // pred_region
          %s151 = ssub.s32 4096, 4096
          %152 = vsyncadd [#allocation4], %s151
          %s153 = sshll.u32 [#allocation3], 4
          %s154 = int_to_ptr.vmem [resolvable:$true] %s153
          %159 = dma.hbm_to_vmem [thread:$0]  %s2, 4096, %s154, [#allocation4], 256, 256, 16
        $region20: #{tpu_custom_call.1} parent=11 // pred_fallthru
          _
        // Predicated region
        $region21: #{tpu_custom_call.1} parent=11 // pred_check
          %p160 = pneg %p103
        $region22: #{tpu_custom_call.1} parent=11 // pred_check_branch
          %162 = sbr.rel (%p160) target = $region24
        $region23: #{tpu_custom_call.1} parent=11 // pred_region
          _
        $region24: #{tpu_custom_call.1} parent=11 // pred_fallthru
          _
      $region12: #{tpu_custom_call.1} parent=5 // pred_fallthru
        _
      %p163 = scmp.lt.s32.totalorder %s14, 2
      // Predicated region
      $region25: #{tpu_custom_call.1} parent=5 // pred_check
        %p164 = pneg %p163
      $region26: #{tpu_custom_call.1} parent=5 // pred_check_branch
        %166 = sbr.rel (%p164) target = $region28
      $region27: #{tpu_custom_call.1} parent=5 // pred_region
        // Predicated region
        $region29: #{tpu_custom_call.1} parent=27 // pred_check
          %p167 = pneg %p34
        $region30: #{tpu_custom_call.1} parent=27 // pred_check_branch
          %169 = sbr.rel (%p167) target = $region32
        $region31: #{tpu_custom_call.1} parent=27 // pred_region
          %p170 = scmp.lt.s32.totalorder %s14, 1
          %s171 = scalar_select %p170, %s14, 1
          %s172 = smul.addr %s171, 8
          %s173 = scalar_lea.vmem %s0, %s172
        $region32: #{tpu_custom_call.1} parent=27 // pred_fallthru
          _
      $region28: #{tpu_custom_call.1} parent=5 // pred_fallthru
        _
      %p174 = scmp.le.s32.totalorder 1, %s14
      %p175 = scmp.lt.s32.totalorder %s14, 3
      %p176 = pnand %p174, %p175
      %p177 = pneg %p176
      // Predicated region
      $region33: #{tpu_custom_call.1} parent=5 // pred_check
        _
      $region34: #{tpu_custom_call.1} parent=5 // pred_check_branch
        %179 = sbr.rel (%p176) target = $region36
      $region35: #{tpu_custom_call.1} parent=5 // pred_region
        %s180 = ssub.s32 %s14, 1
        // Predicated region
        $region37: #{tpu_custom_call.1} parent=35 // pred_check
          %p181 = pneg %p82
        $region38: #{tpu_custom_call.1} parent=35 // pred_check_branch
          %183 = sbr.rel (%p181) target = $region40
        $region39: #{tpu_custom_call.1} parent=35 // pred_region
          %184 = dma.done [#allocation4], 4096
        $region40: #{tpu_custom_call.1} parent=35 // pred_fallthru
          _
        %p185 = scmp.lt.s32.totalorder %s19, 1
        %s186 = scalar_select %p185, %s19, 1
        %s187 = smul.addr %s186, 8
        %s188 = scalar_lea.vmem %s0, %s187
        %p189 = pneg %p40
        %p190 = pneg %p37
        %p191 = pneg %p61
        %p192 = pneg %p58
        %p193 = pneg %p82
        %p194 = pneg %p79
        %p195 = pneg %p103
        %p196 = pneg %p100
        %p197 = pneg %p129
        %p198 = pneg %p126
        %s199 = sand.u32 %s116, 1
        %s200 = scalar_lea.sflag [#allocation5], %s199
        %s201 = sand.u32 %s116, 1
        %s202 = smul.addr %s201, 8
        %s203 = scalar_lea.vmem [#allocation6], %s202
        %p204 = scmp.lt.s32.totalorder %s19, 1
        %s205 = scalar_select %p204, %s19, 1
        %s206 = smul.addr %s205, 8
        %s207 = scalar_lea.vmem %s0, %s206
        %v209 = vld [vmem:[%s207] sm:$0xff]
        %v210 = vld [vmem:[%s1] sm:$0xf]
        %v211 = vld [vmem:[%s3] sm:$0xf]
        %213 = vset.pattern.permute.xlu0 0
        %214 = vperm.xlu0 %213, %v209
        %v215 = vpop.permute.xlu0 %214
        %v218 = vlaneseq
        %v219 = vshrl.u32 %v218, 7
        %v220 = vsub.s32 0, %v219
        %v221 = vrot.slane %v210, %v220
        %v222 = vlaneseq
        %v223 = vshrl.u32 %v222, 7
        %v224 = vsub.s32 1, %v223
        %v225 = vrot.slane %v210, %v224
        %v226 = vlaneseq
        %v227 = vshrl.u32 %v226, 7
        %v228 = vsub.s32 2, %v227
        %v229 = vrot.slane %v210, %v228
        %v230 = vlaneseq
        %v231 = vshrl.u32 %v230, 7
        %v232 = vsub.s32 3, %v231
        %v233 = vrot.slane %v210, %v232
        %v238 = vmul.f32 %v215, %v221
        %v239 = vmul.f32 %v215, %v225
        %v240 = vmul.f32 %v215, %v229
        %v241 = vmul.f32 %v215, %v233
        %v243 = vlaneseq
        %v244 = vshrl.u32 %v243, 7
        %v245 = vsub.s32 0, %v244
        %v246 = vrot.slane %v211, %v245
        %v247 = vlaneseq
        %v248 = vshrl.u32 %v247, 7
        %v249 = vsub.s32 1, %v248
        %v250 = vrot.slane %v211, %v249
        %v251 = vlaneseq
        %v252 = vshrl.u32 %v251, 7
        %v253 = vsub.s32 2, %v252
        %v254 = vrot.slane %v211, %v253
        %v255 = vlaneseq
        %v256 = vshrl.u32 %v255, 7
        %v257 = vsub.s32 3, %v256
        %v258 = vrot.slane %v211, %v257
        %v263 = vadd.f32 %v238, %v246
        %v264 = vadd.f32 %v239, %v250
        %v265 = vadd.f32 %v240, %v254
        %v266 = vadd.f32 %v241, %v258
        %267 = vst [vmem:[#allocation2] sm:$0xff] %v263
        %268 = vst [vmem:[#allocation2 + $0x8] sm:$0xff] %v264
        %269 = vst [vmem:[#allocation2 + $0x10] sm:$0xff] %v265
        %270 = vst [vmem:[#allocation2 + $0x18] sm:$0xff] %v266
        %271 = vset.pattern.permute.xlu0 1
        %272 = vperm.xlu0 %271, %v209
        %v273 = vpop.permute.xlu0 %272
        %v275 = vmul.f32 %v273, %v221
        %v276 = vmul.f32 %v273, %v225
        %v277 = vmul.f32 %v273, %v229
        %v278 = vmul.f32 %v273, %v233
        %v279 = vadd.f32 %v275, %v246
        %v280 = vadd.f32 %v276, %v250
        %v281 = vadd.f32 %v277, %v254
        %v282 = vadd.f32 %v278, %v258
        %s283 = scalar_lea.vmem [#allocation2], 32
        %284 = vst [vmem:[%s283] sm:$0xff] %v279
        %285 = vst [vmem:[%s283 + $0x8] sm:$0xff] %v280
        %286 = vst [vmem:[%s283 + $0x10] sm:$0xff] %v281
        %287 = vst [vmem:[%s283 + $0x18] sm:$0xff] %v282
        %288 = vset.pattern.permute.xlu0 2
        %289 = vperm.xlu0 %288, %v209
        %v290 = vpop.permute.xlu0 %289
        %v292 = vmul.f32 %v290, %v221
        %v293 = vmul.f32 %v290, %v225
        %v294 = vmul.f32 %v290, %v229
        %v295 = vmul.f32 %v290, %v233
        %v296 = vadd.f32 %v292, %v246
        %v297 = vadd.f32 %v293, %v250
        %v298 = vadd.f32 %v294, %v254
        %v299 = vadd.f32 %v295, %v258
        %s300 = scalar_lea.vmem [#allocation2], 64
        %301 = vst [vmem:[%s300] sm:$0xff] %v296
        %302 = vst [vmem:[%s300 + $0x8] sm:$0xff] %v297
        %303 = vst [vmem:[%s300 + $0x10] sm:$0xff] %v298
        %304 = vst [vmem:[%s300 + $0x18] sm:$0xff] %v299
        %305 = vset.pattern.permute.xlu0 3
        %306 = vperm.xlu0 %305, %v209
        %v307 = vpop.permute.xlu0 %306
        %v309 = vmul.f32 %v307, %v221
        %v310 = vmul.f32 %v307, %v225
        %v311 = vmul.f32 %v307, %v229
        %v312 = vmul.f32 %v307, %v233
        %v313 = vadd.f32 %v309, %v246
        %v314 = vadd.f32 %v310, %v250
        %v315 = vadd.f32 %v311, %v254
        %v316 = vadd.f32 %v312, %v258
        %s317 = scalar_lea.vmem [#allocation2], 96
        %318 = vst [vmem:[%s317] sm:$0xff] %v313
        %319 = vst [vmem:[%s317 + $0x8] sm:$0xff] %v314
        %320 = vst [vmem:[%s317 + $0x10] sm:$0xff] %v315
        %321 = vst [vmem:[%s317 + $0x18] sm:$0xff] %v316
        %322 = vset.pattern.permute.xlu0 4
        %323 = vperm.xlu0 %322, %v209
        %v324 = vpop.permute.xlu0 %323
        %v326 = vmul.f32 %v324, %v221
        %v327 = vmul.f32 %v324, %v225
        %v328 = vmul.f32 %v324, %v229
        %v329 = vmul.f32 %v324, %v233
        %v330 = vadd.f32 %v326, %v246
        %v331 = vadd.f32 %v327, %v250
        %v332 = vadd.f32 %v328, %v254
        %v333 = vadd.f32 %v329, %v258
        %s334 = scalar_lea.vmem [#allocation2], 128
        %335 = vst [vmem:[%s334] sm:$0xff] %v330
        %336 = vst [vmem:[%s334 + $0x8] sm:$0xff] %v331
        %337 = vst [vmem:[%s334 + $0x10] sm:$0xff] %v332
        %338 = vst [vmem:[%s334 + $0x18] sm:$0xff] %v333
        %339 = vset.pattern.permute.xlu0 5
        %340 = vperm.xlu0 %339, %v209
        %v341 = vpop.permute.xlu0 %340
        %v343 = vmul.f32 %v341, %v221
        %v344 = vmul.f32 %v341, %v225
        %v345 = vmul.f32 %v341, %v229
        %v346 = vmul.f32 %v341, %v233
        %v347 = vadd.f32 %v343, %v246
        %v348 = vadd.f32 %v344, %v250
        %v349 = vadd.f32 %v345, %v254
        %v350 = vadd.f32 %v346, %v258
        %s351 = scalar_lea.vmem [#allocation2], 160
        %352 = vst [vmem:[%s351] sm:$0xff] %v347
        %353 = vst [vmem:[%s351 + $0x8] sm:$0xff] %v348
        %354 = vst [vmem:[%s351 + $0x10] sm:$0xff] %v349
        %355 = vst [vmem:[%s351 + $0x18] sm:$0xff] %v350
        %356 = vset.pattern.permute.xlu0 6
        %357 = vperm.xlu0 %356, %v209
        %v358 = vpop.permute.xlu0 %357
        %v360 = vmul.f32 %v358, %v221
        %v361 = vmul.f32 %v358, %v225
        %v362 = vmul.f32 %v358, %v229
        %v363 = vmul.f32 %v358, %v233
        %v364 = vadd.f32 %v360, %v246
        %v365 = vadd.f32 %v361, %v250
        %v366 = vadd.f32 %v362, %v254
        %v367 = vadd.f32 %v363, %v258
        %s368 = scalar_lea.vmem [#allocation2], 192
        %369 = vst [vmem:[%s368] sm:$0xff] %v364
        %370 = vst [vmem:[%s368 + $0x8] sm:$0xff] %v365
        %371 = vst [vmem:[%s368 + $0x10] sm:$0xff] %v366
        %372 = vst [vmem:[%s368 + $0x18] sm:$0xff] %v367
        %373 = vset.pattern.permute.xlu0 7
        %374 = vperm.xlu0 %373, %v209
        %v375 = vpop.permute.xlu0 %374
        %v377 = vmul.f32 %v375, %v221
        %v378 = vmul.f32 %v375, %v225
        %v379 = vmul.f32 %v375, %v229
        %v380 = vmul.f32 %v375, %v233
        %v381 = vadd.f32 %v377, %v246
        %v382 = vadd.f32 %v378, %v250
        %v383 = vadd.f32 %v379, %v254
        %v384 = vadd.f32 %v380, %v258
        %s385 = scalar_lea.vmem [#allocation2], 224
        %386 = vst [vmem:[%s385] sm:$0xff] %v381
        %387 = vst [vmem:[%s385 + $0x8] sm:$0xff] %v382
        %388 = vst [vmem:[%s385 + $0x10] sm:$0xff] %v383
        %389 = vst [vmem:[%s385 + $0x18] sm:$0xff] %v384
        %v390 = vld [vmem:[#allocation3] sm:$0xff]
        %v391 = vld [vmem:[#allocation3 + $0x8] sm:$0xff]
        %v392 = vld [vmem:[#allocation3 + $0x10] sm:$0xff]
        %v393 = vld [vmem:[#allocation3 + $0x18] sm:$0xff]
        %v394 = vld [vmem:[#allocation3 + $0x20] sm:$0xff]
        %v395 = vld [vmem:[#allocation3 + $0x28] sm:$0xff]
        %v396 = vld [vmem:[#allocation3 + $0x30] sm:$0xff]
        %v397 = vld [vmem:[#allocation3 + $0x38] sm:$0xff]
        %v398 = vld [vmem:[#allocation3 + $0x40] sm:$0xff]
        %v399 = vld [vmem:[#allocation3 + $0x48] sm:$0xff]
        %v400 = vld [vmem:[#allocation3 + $0x50] sm:$0xff]
        %v401 = vld [vmem:[#allocation3 + $0x58] sm:$0xff]
        %v402 = vld [vmem:[#allocation3 + $0x60] sm:$0xff]
        %v403 = vld [vmem:[#allocation3 + $0x68] sm:$0xff]
        %v404 = vld [vmem:[#allocation3 + $0x70] sm:$0xff]
        %v405 = vld [vmem:[#allocation3 + $0x78] sm:$0xff]
        %v406 = vld [vmem:[#allocation3 + $0x80] sm:$0xff]
        %v407 = vld [vmem:[#allocation3 + $0x88] sm:$0xff]
        %v408 = vld [vmem:[#allocation3 + $0x90] sm:$0xff]
        %v409 = vld [vmem:[#allocation3 + $0x98] sm:$0xff]
        %v410 = vld [vmem:[#allocation3 + $0xa0] sm:$0xff]
        %v411 = vld [vmem:[#allocation3 + $0xa8] sm:$0xff]
        %v412 = vld [vmem:[#allocation3 + $0xb0] sm:$0xff]
        %v413 = vld [vmem:[#allocation3 + $0xb8] sm:$0xff]
        %v414 = vld [vmem:[#allocation3 + $0xc0] sm:$0xff]
        %v415 = vld [vmem:[#allocation3 + $0xc8] sm:$0xff]
        %v416 = vld [vmem:[#allocation3 + $0xd0] sm:$0xff]
        %v417 = vld [vmem:[#allocation3 + $0xd8] sm:$0xff]
        %v418 = vld [vmem:[#allocation3 + $0xe0] sm:$0xff]
        %v419 = vld [vmem:[#allocation3 + $0xe8] sm:$0xff]
        %v420 = vld [vmem:[#allocation3 + $0xf0] sm:$0xff]
        %v421 = vld [vmem:[#allocation3 + $0xf8] sm:$0xff]
        %v422 = vld [vmem:[#allocation2] sm:$0xff]
        %v423 = vld [vmem:[#allocation2 + $0x8] sm:$0xff]
        %v424 = vld [vmem:[#allocation2 + $0x10] sm:$0xff]
        %v425 = vld [vmem:[#allocation2 + $0x18] sm:$0xff]
        %v458 = vunpack.c.l.b16 %v390
        %v459 = vunpack.c.h.b16 %v390
        %v460 = vunpack.c.l.b16 %v391
        %v461 = vunpack.c.h.b16 %v391
        %v462 = vunpack.c.l.b16 %v392
        %v463 = vunpack.c.h.b16 %v392
        %v464 = vunpack.c.l.b16 %v393
        %v465 = vunpack.c.h.b16 %v393
        %v466 = vunpack.c.l.b16 %v394
        %v467 = vunpack.c.h.b16 %v394
        %v468 = vunpack.c.l.b16 %v395
        %v469 = vunpack.c.h.b16 %v395
        %v470 = vunpack.c.l.b16 %v396
        %v471 = vunpack.c.h.b16 %v396
        %v472 = vunpack.c.l.b16 %v397
        %v473 = vunpack.c.h.b16 %v397
        %v474 = vunpack.c.l.b16 %v398
        %v475 = vunpack.c.h.b16 %v398
        %v476 = vunpack.c.l.b16 %v399
        %v477 = vunpack.c.h.b16 %v399
        %v478 = vunpack.c.l.b16 %v400
        %v479 = vunpack.c.h.b16 %v400
        %v480 = vunpack.c.l.b16 %v401
        %v481 = vunpack.c.h.b16 %v401
        %v482 = vunpack.c.l.b16 %v402
        %v483 = vunpack.c.h.b16 %v402
        %v484 = vunpack.c.l.b16 %v403
        %v485 = vunpack.c.h.b16 %v403
        %v486 = vunpack.c.l.b16 %v404
        %v487 = vunpack.c.h.b16 %v404
        %v488 = vunpack.c.l.b16 %v405
        %v489 = vunpack.c.h.b16 %v405
        %v490 = vunpack.c.l.b16 %v406
        %v491 = vunpack.c.h.b16 %v406
        %v492 = vunpack.c.l.b16 %v407
        %v493 = vunpack.c.h.b16 %v407
        %v494 = vunpack.c.l.b16 %v408
        %v495 = vunpack.c.h.b16 %v408
        %v496 = vunpack.c.l.b16 %v409
        %v497 = vunpack.c.h.b16 %v409
        %v498 = vunpack.c.l.b16 %v410
        %v499 = vunpack.c.h.b16 %v410
        %v500 = vunpack.c.l.b16 %v411
        %v501 = vunpack.c.h.b16 %v411
        %v502 = vunpack.c.l.b16 %v412
        %v503 = vunpack.c.h.b16 %v412
        %v504 = vunpack.c.l.b16 %v413
        %v505 = vunpack.c.h.b16 %v413
        %v506 = vunpack.c.l.b16 %v414
        %v507 = vunpack.c.h.b16 %v414
        %v508 = vunpack.c.l.b16 %v415
        %v509 = vunpack.c.h.b16 %v415
        %v510 = vunpack.c.l.b16 %v416
        %v511 = vunpack.c.h.b16 %v416
        %v512 = vunpack.c.l.b16 %v417
        %v513 = vunpack.c.h.b16 %v417
        %v514 = vunpack.c.l.b16 %v418
        %v515 = vunpack.c.h.b16 %v418
        %v516 = vunpack.c.l.b16 %v419
        %v517 = vunpack.c.h.b16 %v419
        %v518 = vunpack.c.l.b16 %v420
        %v519 = vunpack.c.h.b16 %v420
        %v520 = vunpack.c.l.b16 %v421
        %v521 = vunpack.c.h.b16 %v421
        %v522 = vpack.c.b16 %v462, %v458
        %v523 = vpack.c.b16 %v463, %v459
        %v524 = vpack.c.b16 %v464, %v460
        %v525 = vpack.c.b16 %v465, %v461
        %v526 = vpack.c.b16 %v470, %v466
        %v527 = vpack.c.b16 %v471, %v467
        %v528 = vpack.c.b16 %v472, %v468
        %v529 = vpack.c.b16 %v473, %v469
        %v530 = vpack.c.b16 %v478, %v474
        %v531 = vpack.c.b16 %v479, %v475
        %v532 = vpack.c.b16 %v480, %v476
        %v533 = vpack.c.b16 %v481, %v477
        %v534 = vpack.c.b16 %v486, %v482
        %v535 = vpack.c.b16 %v487, %v483
        %v536 = vpack.c.b16 %v488, %v484
        %v537 = vpack.c.b16 %v489, %v485
        %v538 = vpack.c.b16 %v494, %v490
        %v539 = vpack.c.b16 %v495, %v491
        %v540 = vpack.c.b16 %v496, %v492
        %v541 = vpack.c.b16 %v497, %v493
        %v542 = vpack.c.b16 %v502, %v498
        %v543 = vpack.c.b16 %v503, %v499
        %v544 = vpack.c.b16 %v504, %v500
        %v545 = vpack.c.b16 %v505, %v501
        %v546 = vpack.c.b16 %v510, %v506
        %v547 = vpack.c.b16 %v511, %v507
        %v548 = vpack.c.b16 %v512, %v508
        %v549 = vpack.c.b16 %v513, %v509
        %v550 = vpack.c.b16 %v518, %v514
        %v551 = vpack.c.b16 %v519, %v515
        %v552 = vpack.c.b16 %v520, %v516
        %v553 = vpack.c.b16 %v521, %v517
        %586 = vmatprep.subr.bf16.mxu0 %v551
        %587 = vmatpush1.bf16.msra.mxu0 %v550
        %588 = vmatprep.subr.bf16.mxu0 %v547
        %589 = vmatpush1.bf16.msra.mxu0 %v546
        %590 = vmatprep.subr.bf16.mxu0 %v543
        %591 = vmatpush1.bf16.msra.mxu0 %v542
        %592 = vmatprep.subr.bf16.mxu0 %v539
        %593 = vmatpush1.bf16.msra.mxu0 %v538
        %594 = vmatprep.subr.bf16.mxu0 %v535
        %595 = vmatpush1.bf16.msra.mxu0 %v534
        %596 = vmatprep.subr.bf16.mxu0 %v531
        %597 = vmatpush1.bf16.msra.mxu0 %v530
        %598 = vmatprep.subr.bf16.mxu0 %v527
        %599 = vmatpush1.bf16.msra.mxu0 %v526
        %600 = vmatprep.subr.bf16.mxu0 %v523
        %601 = vmatpush1.bf16.msra.mxu0 %v522
        %602 = vmatprep.subr.bf16.mxu0 0
        %603 = vmatpush2.bf16.msra.mxu0 0
        %604 = vmatprep.subr.bf16.mxu0 0
        %605 = vmatpush2.bf16.msra.mxu0 0
        %606 = vmatprep.subr.bf16.mxu0 0
        %607 = vmatpush2.bf16.msra.mxu0 0
        %608 = vmatprep.subr.bf16.mxu0 0
        %609 = vmatpush2.bf16.msra.mxu0 0
        %610 = vmatprep.subr.bf16.mxu0 0
        %611 = vmatpush2.bf16.msra.mxu0 0
        %612 = vmatprep.subr.bf16.mxu0 0
        %613 = vmatpush2.bf16.msra.mxu0 0
        %614 = vmatprep.subr.bf16.mxu0 0
        %615 = vmatpush2.bf16.msra.mxu0 0
        %616 = vmatprep.subr.bf16.mxu0 0
        %617 = vmatpush2.bf16.msra.mxu0 0
        %618 = vmatprep.mubr.bf16.mxu0 0
        %619 = vmatmul.mubr.bf16.gmra.mxu0 0
        %v620 = vpop.f32.mrf.mxu0
        %v621 = vadd.f32 0.0, %v620
        %v622 = vpop.f32.mrf.mxu0
        %v623 = vadd.f32 0.0, %v622
        %v624 = vpop.f32.mrf.mxu0
        %v625 = vpop.f32.mrf.mxu0
        %626 = vdwg.mxu0
        %627 = vmatprep.subr.bf16.mxu0 %v553
        %628 = vmatpush1.bf16.msra.mxu0 %v552
        %629 = vmatprep.subr.bf16.mxu0 %v549
        %630 = vmatpush1.bf16.msra.mxu0 %v548
        %631 = vmatprep.subr.bf16.mxu0 %v545
        %632 = vmatpush1.bf16.msra.mxu0 %v544
        %633 = vmatprep.subr.bf16.mxu0 %v541
        %634 = vmatpush1.bf16.msra.mxu0 %v540
        %635 = vmatprep.subr.bf16.mxu0 %v537
        %636 = vmatpush1.bf16.msra.mxu0 %v536
        %637 = vmatprep.subr.bf16.mxu0 %v533
        %638 = vmatpush1.bf16.msra.mxu0 %v532
        %639 = vmatprep.subr.bf16.mxu0 %v529
        %640 = vmatpush1.bf16.msra.mxu0 %v528
        %641 = vmatprep.subr.bf16.mxu0 %v525
        %642 = vmatpush1.bf16.msra.mxu0 %v524
        %643 = vmatprep.subr.bf16.mxu0 0
        %644 = vmatpush2.bf16.msra.mxu0 0
        %645 = vmatprep.subr.bf16.mxu0 0
        %646 = vmatpush2.bf16.msra.mxu0 0
        %647 = vmatprep.subr.bf16.mxu0 0
        %648 = vmatpush2.bf16.msra.mxu0 0
        %649 = vmatprep.subr.bf16.mxu0 0
        %650 = vmatpush2.bf16.msra.mxu0 0
        %651 = vmatprep.subr.bf16.mxu0 0
        %652 = vmatpush2.bf16.msra.mxu0 0
        %653 = vmatprep.subr.bf16.mxu0 0
        %654 = vmatpush2.bf16.msra.mxu0 0
        %655 = vmatprep.subr.bf16.mxu0 0
        %656 = vmatpush2.bf16.msra.mxu0 0
        %657 = vmatprep.subr.bf16.mxu0 0
        %658 = vmatpush2.bf16.msra.mxu0 0
        %659 = vmatprep.mubr.bf16.mxu0 0
        %660 = vmatmul.mubr.bf16.gmra.mxu0 0
        %v661 = vpop.f32.mrf.mxu0
        %v662 = vadd.f32 0.0, %v661
        %v663 = vpop.f32.mrf.mxu0
        %v664 = vadd.f32 0.0, %v663
        %v665 = vpop.f32.mrf.mxu0
        %v666 = vpop.f32.mrf.mxu0
        %667 = vdwg.mxu0
        %v668 = vadd.f32 %v422, %v621
        %v669 = vadd.f32 %v423, %v623
        %v670 = vadd.f32 %v424, %v662
        %v671 = vadd.f32 %v425, %v664
        %v672 = vmul.f32 %v668, 0.5
        %v673 = vmul.f32 %v669, 0.5
        %v674 = vmul.f32 %v670, 0.5
        %v675 = vtanh.pop %v672
        %v676 = vtanh.pop %v673
        %v677 = vtanh.pop %v674
        %v678 = vadd.f32 %v675, 1.0
        %v679 = vadd.f32 %v676, 1.0
        %v680 = vadd.f32 %v677, 1.0
        %v681 = vmul.f32 %v678, 0.5
        %v682 = vmul.f32 %v679, 0.5
        %v683 = vmul.f32 %v680, 0.5
        %v684 = vtanh.pop %v671
        %v685 = vmul.f32 %v682, 0.0
        %v686 = vmul.f32 %v681, %v684
        %v687 = vadd.f32 %v685, %v686
        %v688 = vtanh.pop %v687
        %v689 = vmul.f32 %v683, %v688
        %v690 = vld [vmem:[%s283] sm:$0xff]
        %v691 = vld [vmem:[%s283 + $0x8] sm:$0xff]
        %v692 = vld [vmem:[%s283 + $0x10] sm:$0xff]
        %v693 = vld [vmem:[%s283 + $0x18] sm:$0xff]
        %v694 = vpack.c.bf16 %v689, %v689
        %695 = vmatprep.subr.bf16.mxu0 %v551
        %696 = vmatpush1.bf16.msra.mxu0 %v550
        %697 = vmatprep.subr.bf16.mxu0 %v547
        %698 = vmatpush1.bf16.msra.mxu0 %v546
        %699 = vmatprep.subr.bf16.mxu0 %v543
        %700 = vmatpush1.bf16.msra.mxu0 %v542
        %701 = vmatprep.subr.bf16.mxu0 %v539
        %702 = vmatpush1.bf16.msra.mxu0 %v538
        %703 = vmatprep.subr.bf16.mxu0 %v535
        %704 = vmatpush1.bf16.msra.mxu0 %v534
        %705 = vmatprep.subr.bf16.mxu0 %v531
        %706 = vmatpush1.bf16.msra.mxu0 %v530
        %707 = vmatprep.subr.bf16.mxu0 %v527
        %708 = vmatpush1.bf16.msra.mxu0 %v526
        %709 = vmatprep.subr.bf16.mxu0 %v523
        %710 = vmatpush1.bf16.msra.mxu0 %v522
        %711 = vmatprep.subr.bf16.mxu0 0
        %712 = vmatpush2.bf16.msra.mxu0 0
        %713 = vmatprep.subr.bf16.mxu0 0
        %714 = vmatpush2.bf16.msra.mxu0 0
        %715 = vmatprep.subr.bf16.mxu0 0
        %716 = vmatpush2.bf16.msra.mxu0 0
        %717 = vmatprep.subr.bf16.mxu0 0
        %718 = vmatpush2.bf16.msra.mxu0 0
        %719 = vmatprep.subr.bf16.mxu0 0
        %720 = vmatpush2.bf16.msra.mxu0 0
        %721 = vmatprep.subr.bf16.mxu0 0
        %722 = vmatpush2.bf16.msra.mxu0 0
        %723 = vmatprep.subr.bf16.mxu0 0
        %724 = vmatpush2.bf16.msra.mxu0 0
        %725 = vmatprep.subr.bf16.mxu0 0
        %726 = vmatpush2.bf16.msra.mxu0 0
        %727 = vmatprep.mubr.bf16.mxu0 0
        %728 = vmatmul.mubr.bf16.gmra.mxu0 %v694
        %v729 = vpop.f32.mrf.mxu0
        %v730 = vadd.f32 0.0, %v729
        %v731 = vpop.f32.mrf.mxu0
        %v732 = vadd.f32 0.0, %v731
        %v733 = vpop.f32.mrf.mxu0
        %v734 = vpop.f32.mrf.mxu0
        %735 = vdwg.mxu0
        %736 = vmatprep.subr.bf16.mxu0 %v553
        %737 = vmatpush1.bf16.msra.mxu0 %v552
        %738 = vmatprep.subr.bf16.mxu0 %v549
        %739 = vmatpush1.bf16.msra.mxu0 %v548
        %740 = vmatprep.subr.bf16.mxu0 %v545
        %741 = vmatpush1.bf16.msra.mxu0 %v544
        %742 = vmatprep.subr.bf16.mxu0 %v541
        %743 = vmatpush1.bf16.msra.mxu0 %v540
        %744 = vmatprep.subr.bf16.mxu0 %v537
        %745 = vmatpush1.bf16.msra.mxu0 %v536
        %746 = vmatprep.subr.bf16.mxu0 %v533
        %747 = vmatpush1.bf16.msra.mxu0 %v532
        %748 = vmatprep.subr.bf16.mxu0 %v529
        %749 = vmatpush1.bf16.msra.mxu0 %v528
        %750 = vmatprep.subr.bf16.mxu0 %v525
        %751 = vmatpush1.bf16.msra.mxu0 %v524
        %752 = vmatprep.subr.bf16.mxu0 0
        %753 = vmatpush2.bf16.msra.mxu0 0
        %754 = vmatprep.subr.bf16.mxu0 0
        %755 = vmatpush2.bf16.msra.mxu0 0
        %756 = vmatprep.subr.bf16.mxu0 0
        %757 = vmatpush2.bf16.msra.mxu0 0
        %758 = vmatprep.subr.bf16.mxu0 0
        %759 = vmatpush2.bf16.msra.mxu0 0
        %760 = vmatprep.subr.bf16.mxu0 0
        %761 = vmatpush2.bf16.msra.mxu0 0
        %762 = vmatprep.subr.bf16.mxu0 0
        %763 = vmatpush2.bf16.msra.mxu0 0
        %764 = vmatprep.subr.bf16.mxu0 0
        %765 = vmatpush2.bf16.msra.mxu0 0
        %766 = vmatprep.subr.bf16.mxu0 0
        %767 = vmatpush2.bf16.msra.mxu0 0
        %768 = vmatprep.mubr.bf16.mxu0 0
        %769 = vmatmul.mubr.bf16.gmra.mxu0 %v694
        %v770 = vpop.f32.mrf.mxu0
        %v771 = vadd.f32 0.0, %v770
        %v772 = vpop.f32.mrf.mxu0
        %v773 = vadd.f32 0.0, %v772
        %v774 = vpop.f32.mrf.mxu0
        %v775 = vpop.f32.mrf.mxu0
        %776 = vdwg.mxu0
        %v777 = vadd.f32 %v690, %v730
        %v778 = vadd.f32 %v691, %v732
        %v779 = vadd.f32 %v692, %v771
        %v780 = vadd.f32 %v693, %v773
        %v781 = vmul.f32 %v777, 0.5
        %v782 = vmul.f32 %v778, 0.5
        %v783 = vmul.f32 %v779, 0.5
        %v784 = vtanh.pop %v781
        %v785 = vtanh.pop %v782
        %v786 = vtanh.pop %v783
        %v787 = vadd.f32 %v784, 1.0
        %v788 = vadd.f32 %v785, 1.0
        %v789 = vadd.f32 %v786, 1.0
        %v790 = vmul.f32 %v787, 0.5
        %v791 = vmul.f32 %v788, 0.5
        %v792 = vmul.f32 %v789, 0.5
        %v793 = vtanh.pop %v780
        %v794 = vmul.f32 %v791, %v687
        %v795 = vmul.f32 %v790, %v793
        %v796 = vadd.f32 %v794, %v795
        %v797 = vtanh.pop %v796
        %v798 = vmul.f32 %v792, %v797
        %v799 = vld [vmem:[%s300] sm:$0xff]
        %v800 = vld [vmem:[%s300 + $0x8] sm:$0xff]
        %v801 = vld [vmem:[%s300 + $0x10] sm:$0xff]
        %v802 = vld [vmem:[%s300 + $0x18] sm:$0xff]
        %v803 = vpack.c.bf16 %v798, %v798
        %804 = vmatprep.subr.bf16.mxu0 %v551
        %805 = vmatpush1.bf16.msra.mxu0 %v550
        %806 = vmatprep.subr.bf16.mxu0 %v547
        %807 = vmatpush1.bf16.msra.mxu0 %v546
        %808 = vmatprep.subr.bf16.mxu0 %v543
        %809 = vmatpush1.bf16.msra.mxu0 %v542
        %810 = vmatprep.subr.bf16.mxu0 %v539
        %811 = vmatpush1.bf16.msra.mxu0 %v538
        %812 = vmatprep.subr.bf16.mxu0 %v535
        %813 = vmatpush1.bf16.msra.mxu0 %v534
        %814 = vmatprep.subr.bf16.mxu0 %v531
        %815 = vmatpush1.bf16.msra.mxu0 %v530
        %816 = vmatprep.subr.bf16.mxu0 %v527
        %817 = vmatpush1.bf16.msra.mxu0 %v526
        %818 = vmatprep.subr.bf16.mxu0 %v523
        %819 = vmatpush1.bf16.msra.mxu0 %v522
        %820 = vmatprep.subr.bf16.mxu0 0
        %821 = vmatpush2.bf16.msra.mxu0 0
        %822 = vmatprep.subr.bf16.mxu0 0
        %823 = vmatpush2.bf16.msra.mxu0 0
        %824 = vmatprep.subr.bf16.mxu0 0
        %825 = vmatpush2.bf16.msra.mxu0 0
        %826 = vmatprep.subr.bf16.mxu0 0
        %827 = vmatpush2.bf16.msra.mxu0 0
        %828 = vmatprep.subr.bf16.mxu0 0
        %829 = vmatpush2.bf16.msra.mxu0 0
        %830 = vmatprep.subr.bf16.mxu0 0
        %831 = vmatpush2.bf16.msra.mxu0 0
        %832 = vmatprep.subr.bf16.mxu0 0
        %833 = vmatpush2.bf16.msra.mxu0 0
        %834 = vmatprep.subr.bf16.mxu0 0
        %835 = vmatpush2.bf16.msra.mxu0 0
        %836 = vmatprep.mubr.bf16.mxu0 0
        %837 = vmatmul.mubr.bf16.gmra.mxu0 %v803
        %v838 = vpop.f32.mrf.mxu0
        %v839 = vadd.f32 0.0, %v838
        %v840 = vpop.f32.mrf.mxu0
        %v841 = vadd.f32 0.0, %v840
        %v842 = vpop.f32.mrf.mxu0
        %v843 = vpop.f32.mrf.mxu0
        %844 = vdwg.mxu0
        %845 = vmatprep.subr.bf16.mxu0 %v553
        %846 = vmatpush1.bf16.msra.mxu0 %v552
        %847 = vmatprep.subr.bf16.mxu0 %v549
        %848 = vmatpush1.bf16.msra.mxu0 %v548
        %849 = vmatprep.subr.bf16.mxu0 %v545
        %850 = vmatpush1.bf16.msra.mxu0 %v544
        %851 = vmatprep.subr.bf16.mxu0 %v541
        %852 = vmatpush1.bf16.msra.mxu0 %v540
        %853 = vmatprep.subr.bf16.mxu0 %v537
        %854 = vmatpush1.bf16.msra.mxu0 %v536
        %855 = vmatprep.subr.bf16.mxu0 %v533
        %856 = vmatpush1.bf16.msra.mxu0 %v532
        %857 = vmatprep.subr.bf16.mxu0 %v529
        %858 = vmatpush1.bf16.msra.mxu0 %v528
        %859 = vmatprep.subr.bf16.mxu0 %v525
        %860 = vmatpush1.bf16.msra.mxu0 %v524
        %861 = vmatprep.subr.bf16.mxu0 0
        %862 = vmatpush2.bf16.msra.mxu0 0
        %863 = vmatprep.subr.bf16.mxu0 0
        %864 = vmatpush2.bf16.msra.mxu0 0
        %865 = vmatprep.subr.bf16.mxu0 0
        %866 = vmatpush2.bf16.msra.mxu0 0
        %867 = vmatprep.subr.bf16.mxu0 0
        %868 = vmatpush2.bf16.msra.mxu0 0
        %869 = vmatprep.subr.bf16.mxu0 0
        %870 = vmatpush2.bf16.msra.mxu0 0
        %871 = vmatprep.subr.bf16.mxu0 0
        %872 = vmatpush2.bf16.msra.mxu0 0
        %873 = vmatprep.subr.bf16.mxu0 0
        %874 = vmatpush2.bf16.msra.mxu0 0
        %875 = vmatprep.subr.bf16.mxu0 0
        %876 = vmatpush2.bf16.msra.mxu0 0
        %877 = vmatprep.mubr.bf16.mxu0 0
        %878 = vmatmul.mubr.bf16.gmra.mxu0 %v803
        %v879 = vpop.f32.mrf.mxu0
        %v880 = vadd.f32 0.0, %v879
        %v881 = vpop.f32.mrf.mxu0
        %v882 = vadd.f32 0.0, %v881
        %v883 = vpop.f32.mrf.mxu0
        %v884 = vpop.f32.mrf.mxu0
        %885 = vdwg.mxu0
        %v886 = vadd.f32 %v799, %v839
        %v887 = vadd.f32 %v800, %v841
        %v888 = vadd.f32 %v801, %v880
        %v889 = vadd.f32 %v802, %v882
        %v890 = vmul.f32 %v886, 0.5
        %v891 = vmul.f32 %v887, 0.5
        %v892 = vmul.f32 %v888, 0.5
        %v893 = vtanh.pop %v890
        %v894 = vtanh.pop %v891
        %v895 = vtanh.pop %v892
        %v896 = vadd.f32 %v893, 1.0
        %v897 = vadd.f32 %v894, 1.0
        %v898 = vadd.f32 %v895, 1.0
        %v899 = vmul.f32 %v896, 0.5
        %v900 = vmul.f32 %v897, 0.5
        %v901 = vmul.f32 %v898, 0.5
        %v902 = vtanh.pop %v889
        %v903 = vmul.f32 %v900, %v796
        %v904 = vmul.f32 %v899, %v902
        %v905 = vadd.f32 %v903, %v904
        %v906 = vtanh.pop %v905
        %v907 = vmul.f32 %v901, %v906
        %v908 = vld [vmem:[%s317] sm:$0xff]
        %v909 = vld [vmem:[%s317 + $0x8] sm:$0xff]
        %v910 = vld [vmem:[%s317 + $0x10] sm:$0xff]
        %v911 = vld [vmem:[%s317 + $0x18] sm:$0xff]
        %v912 = vpack.c.bf16 %v907, %v907
        %913 = vmatprep.subr.bf16.mxu0 %v551
        %914 = vmatpush1.bf16.msra.mxu0 %v550
        %915 = vmatprep.subr.bf16.mxu0 %v547
        %916 = vmatpush1.bf16.msra.mxu0 %v546
        %917 = vmatprep.subr.bf16.mxu0 %v543
        %918 = vmatpush1.bf16.msra.mxu0 %v542
        %919 = vmatprep.subr.bf16.mxu0 %v539
        %920 = vmatpush1.bf16.msra.mxu0 %v538
        %921 = vmatprep.subr.bf16.mxu0 %v535
        %922 = vmatpush1.bf16.msra.mxu0 %v534
        %923 = vmatprep.subr.bf16.mxu0 %v531
        %924 = vmatpush1.bf16.msra.mxu0 %v530
        %925 = vmatprep.subr.bf16.mxu0 %v527
        %926 = vmatpush1.bf16.msra.mxu0 %v526
        %927 = vmatprep.subr.bf16.mxu0 %v523
        %928 = vmatpush1.bf16.msra.mxu0 %v522
        %929 = vmatprep.subr.bf16.mxu0 0
        %930 = vmatpush2.bf16.msra.mxu0 0
        %931 = vmatprep.subr.bf16.mxu0 0
        %932 = vmatpush2.bf16.msra.mxu0 0
        %933 = vmatprep.subr.bf16.mxu0 0
        %934 = vmatpush2.bf16.msra.mxu0 0
        %935 = vmatprep.subr.bf16.mxu0 0
        %936 = vmatpush2.bf16.msra.mxu0 0
        %937 = vmatprep.subr.bf16.mxu0 0
        %938 = vmatpush2.bf16.msra.mxu0 0
        %939 = vmatprep.subr.bf16.mxu0 0
        %940 = vmatpush2.bf16.msra.mxu0 0
        %941 = vmatprep.subr.bf16.mxu0 0
        %942 = vmatpush2.bf16.msra.mxu0 0
        %943 = vmatprep.subr.bf16.mxu0 0
        %944 = vmatpush2.bf16.msra.mxu0 0
        %945 = vmatprep.mubr.bf16.mxu0 0
        %946 = vmatmul.mubr.bf16.gmra.mxu0 %v912
        %v947 = vpop.f32.mrf.mxu0
        %v948 = vadd.f32 0.0, %v947
        %v949 = vpop.f32.mrf.mxu0
        %v950 = vadd.f32 0.0, %v949
        %v951 = vpop.f32.mrf.mxu0
        %v952 = vpop.f32.mrf.mxu0
        %953 = vdwg.mxu0
        %954 = vmatprep.subr.bf16.mxu0 %v553
        %955 = vmatpush1.bf16.msra.mxu0 %v552
        %956 = vmatprep.subr.bf16.mxu0 %v549
        %957 = vmatpush1.bf16.msra.mxu0 %v548
        %958 = vmatprep.subr.bf16.mxu0 %v545
        %959 = vmatpush1.bf16.msra.mxu0 %v544
        %960 = vmatprep.subr.bf16.mxu0 %v541
        %961 = vmatpush1.bf16.msra.mxu0 %v540
        %962 = vmatprep.subr.bf16.mxu0 %v537
        %963 = vmatpush1.bf16.msra.mxu0 %v536
        %964 = vmatprep.subr.bf16.mxu0 %v533
        %965 = vmatpush1.bf16.msra.mxu0 %v532
        %966 = vmatprep.subr.bf16.mxu0 %v529
        %967 = vmatpush1.bf16.msra.mxu0 %v528
        %968 = vmatprep.subr.bf16.mxu0 %v525
        %969 = vmatpush1.bf16.msra.mxu0 %v524
        %970 = vmatprep.subr.bf16.mxu0 0
        %971 = vmatpush2.bf16.msra.mxu0 0
        %972 = vmatprep.subr.bf16.mxu0 0
        %973 = vmatpush2.bf16.msra.mxu0 0
        %974 = vmatprep.subr.bf16.mxu0 0
        %975 = vmatpush2.bf16.msra.mxu0 0
        %976 = vmatprep.subr.bf16.mxu0 0
        %977 = vmatpush2.bf16.msra.mxu0 0
        %978 = vmatprep.subr.bf16.mxu0 0
        %979 = vmatpush2.bf16.msra.mxu0 0
        %980 = vmatprep.subr.bf16.mxu0 0
        %981 = vmatpush2.bf16.msra.mxu0 0
        %982 = vmatprep.subr.bf16.mxu0 0
        %983 = vmatpush2.bf16.msra.mxu0 0
        %984 = vmatprep.subr.bf16.mxu0 0
        %985 = vmatpush2.bf16.msra.mxu0 0
        %986 = vmatprep.mubr.bf16.mxu0 0
        %987 = vmatmul.mubr.bf16.gmra.mxu0 %v912
        %v988 = vpop.f32.mrf.mxu0
        %v989 = vadd.f32 0.0, %v988
        %v990 = vpop.f32.mrf.mxu0
        %v991 = vadd.f32 0.0, %v990
        %v992 = vpop.f32.mrf.mxu0
        %v993 = vpop.f32.mrf.mxu0
        %994 = vdwg.mxu0
        %v995 = vadd.f32 %v908, %v948
        %v996 = vadd.f32 %v909, %v950
        %v997 = vadd.f32 %v910, %v989
        %v998 = vadd.f32 %v911, %v991
        %v999 = vmul.f32 %v995, 0.5
        %v1000 = vmul.f32 %v996, 0.5
        %v1001 = vmul.f32 %v997, 0.5
        %v1002 = vtanh.pop %v999
        %v1003 = vtanh.pop %v1000
        %v1004 = vtanh.pop %v1001
        %v1005 = vadd.f32 %v1002, 1.0
        %v1006 = vadd.f32 %v1003, 1.0
        %v1007 = vadd.f32 %v1004, 1.0
        %v1008 = vmul.f32 %v1005, 0.5
        %v1009 = vmul.f32 %v1006, 0.5
        %v1010 = vmul.f32 %v1007, 0.5
        %v1011 = vtanh.pop %v998
        %v1012 = vmul.f32 %v1009, %v905
        %v1013 = vmul.f32 %v1008, %v1011
        %v1014 = vadd.f32 %v1012, %v1013
        %v1015 = vtanh.pop %v1014
        %v1016 = vmul.f32 %v1010, %v1015
        %v1017 = vld [vmem:[%s334] sm:$0xff]
        %v1018 = vld [vmem:[%s334 + $0x8] sm:$0xff]
        %v1019 = vld [vmem:[%s334 + $0x10] sm:$0xff]
        %v1020 = vld [vmem:[%s334 + $0x18] sm:$0xff]
        %v1021 = vpack.c.bf16 %v1016, %v1016
        %1022 = vmatprep.subr.bf16.mxu0 %v551
        %1023 = vmatpush1.bf16.msra.mxu0 %v550
        %1024 = vmatprep.subr.bf16.mxu0 %v547
        %1025 = vmatpush1.bf16.msra.mxu0 %v546
        %1026 = vmatprep.subr.bf16.mxu0 %v543
        %1027 = vmatpush1.bf16.msra.mxu0 %v542
        %1028 = vmatprep.subr.bf16.mxu0 %v539
        %1029 = vmatpush1.bf16.msra.mxu0 %v538
        %1030 = vmatprep.subr.bf16.mxu0 %v535
        %1031 = vmatpush1.bf16.msra.mxu0 %v534
        %1032 = vmatprep.subr.bf16.mxu0 %v531
        %1033 = vmatpush1.bf16.msra.mxu0 %v530
        %1034 = vmatprep.subr.bf16.mxu0 %v527
        %1035 = vmatpush1.bf16.msra.mxu0 %v526
        %1036 = vmatprep.subr.bf16.mxu0 %v523
        %1037 = vmatpush1.bf16.msra.mxu0 %v522
        %1038 = vmatprep.subr.bf16.mxu0 0
        %1039 = vmatpush2.bf16.msra.mxu0 0
        %1040 = vmatprep.subr.bf16.mxu0 0
        %1041 = vmatpush2.bf16.msra.mxu0 0
        %1042 = vmatprep.subr.bf16.mxu0 0
        %1043 = vmatpush2.bf16.msra.mxu0 0
        %1044 = vmatprep.subr.bf16.mxu0 0
        %1045 = vmatpush2.bf16.msra.mxu0 0
        %1046 = vmatprep.subr.bf16.mxu0 0
        %1047 = vmatpush2.bf16.msra.mxu0 0
        %1048 = vmatprep.subr.bf16.mxu0 0
        %1049 = vmatpush2.bf16.msra.mxu0 0
        %1050 = vmatprep.subr.bf16.mxu0 0
        %1051 = vmatpush2.bf16.msra.mxu0 0
        %1052 = vmatprep.subr.bf16.mxu0 0
        %1053 = vmatpush2.bf16.msra.mxu0 0
        %1054 = vmatprep.mubr.bf16.mxu0 0
        %1055 = vmatmul.mubr.bf16.gmra.mxu0 %v1021
        %v1056 = vpop.f32.mrf.mxu0
        %v1057 = vadd.f32 0.0, %v1056
        %v1058 = vpop.f32.mrf.mxu0
        %v1059 = vadd.f32 0.0, %v1058
        %v1060 = vpop.f32.mrf.mxu0
        %v1061 = vpop.f32.mrf.mxu0
        %1062 = vdwg.mxu0
        %1063 = vmatprep.subr.bf16.mxu0 %v553
        %1064 = vmatpush1.bf16.msra.mxu0 %v552
        %1065 = vmatprep.subr.bf16.mxu0 %v549
        %1066 = vmatpush1.bf16.msra.mxu0 %v548
        %1067 = vmatprep.subr.bf16.mxu0 %v545
        %1068 = vmatpush1.bf16.msra.mxu0 %v544
        %1069 = vmatprep.subr.bf16.mxu0 %v541
        %1070 = vmatpush1.bf16.msra.mxu0 %v540
        %1071 = vmatprep.subr.bf16.mxu0 %v537
        %1072 = vmatpush1.bf16.msra.mxu0 %v536
        %1073 = vmatprep.subr.bf16.mxu0 %v533
        %1074 = vmatpush1.bf16.msra.mxu0 %v532
        %1075 = vmatprep.subr.bf16.mxu0 %v529
        %1076 = vmatpush1.bf16.msra.mxu0 %v528
        %1077 = vmatprep.subr.bf16.mxu0 %v525
        %1078 = vmatpush1.bf16.msra.mxu0 %v524
        %1079 = vmatprep.subr.bf16.mxu0 0
        %1080 = vmatpush2.bf16.msra.mxu0 0
        %1081 = vmatprep.subr.bf16.mxu0 0
        %1082 = vmatpush2.bf16.msra.mxu0 0
        %1083 = vmatprep.subr.bf16.mxu0 0
        %1084 = vmatpush2.bf16.msra.mxu0 0
        %1085 = vmatprep.subr.bf16.mxu0 0
        %1086 = vmatpush2.bf16.msra.mxu0 0
        %1087 = vmatprep.subr.bf16.mxu0 0
        %1088 = vmatpush2.bf16.msra.mxu0 0
        %1089 = vmatprep.subr.bf16.mxu0 0
        %1090 = vmatpush2.bf16.msra.mxu0 0
        %1091 = vmatprep.subr.bf16.mxu0 0
        %1092 = vmatpush2.bf16.msra.mxu0 0
        %1093 = vmatprep.subr.bf16.mxu0 0
        %1094 = vmatpush2.bf16.msra.mxu0 0
        %1095 = vmatprep.mubr.bf16.mxu0 0
        %1096 = vmatmul.mubr.bf16.gmra.mxu0 %v1021
        %v1097 = vpop.f32.mrf.mxu0
        %v1098 = vadd.f32 0.0, %v1097
        %v1099 = vpop.f32.mrf.mxu0
        %v1100 = vadd.f32 0.0, %v1099
        %v1101 = vpop.f32.mrf.mxu0
        %v1102 = vpop.f32.mrf.mxu0
        %1103 = vdwg.mxu0
        %v1104 = vadd.f32 %v1017, %v1057
        %v1105 = vadd.f32 %v1018, %v1059
        %v1106 = vadd.f32 %v1019, %v1098
        %v1107 = vadd.f32 %v1020, %v1100
        %v1108 = vmul.f32 %v1104, 0.5
        %v1109 = vmul.f32 %v1105, 0.5
        %v1110 = vmul.f32 %v1106, 0.5
        %v1111 = vtanh.pop %v1108
        %v1112 = vtanh.pop %v1109
        %v1113 = vtanh.pop %v1110
        %v1114 = vadd.f32 %v1111, 1.0
        %v1115 = vadd.f32 %v1112, 1.0
        %v1116 = vadd.f32 %v1113, 1.0
        %v1117 = vmul.f32 %v1114, 0.5
        %v1118 = vmul.f32 %v1115, 0.5
        %v1119 = vmul.f32 %v1116, 0.5
        %v1120 = vtanh.pop %v1107
        %v1121 = vmul.f32 %v1118, %v1014
        %v1122 = vmul.f32 %v1117, %v1120
        %v1123 = vadd.f32 %v1121, %v1122
        %v1124 = vtanh.pop %v1123
        %v1125 = vmul.f32 %v1119, %v1124
        %v1126 = vld [vmem:[%s351] sm:$0xff]
        %v1127 = vld [vmem:[%s351 + $0x8] sm:$0xff]
        %v1128 = vld [vmem:[%s351 + $0x10] sm:$0xff]
        %v1129 = vld [vmem:[%s351 + $0x18] sm:$0xff]
        %v1130 = vpack.c.bf16 %v1125, %v1125
        %1131 = vmatprep.subr.bf16.mxu0 %v551
        %1132 = vmatpush1.bf16.msra.mxu0 %v550
        %1133 = vmatprep.subr.bf16.mxu0 %v547
        %1134 = vmatpush1.bf16.msra.mxu0 %v546
        %1135 = vmatprep.subr.bf16.mxu0 %v543
        %1136 = vmatpush1.bf16.msra.mxu0 %v542
        %1137 = vmatprep.subr.bf16.mxu0 %v539
        %1138 = vmatpush1.bf16.msra.mxu0 %v538
        %1139 = vmatprep.subr.bf16.mxu0 %v535
        %1140 = vmatpush1.bf16.msra.mxu0 %v534
        %1141 = vmatprep.subr.bf16.mxu0 %v531
        %1142 = vmatpush1.bf16.msra.mxu0 %v530
        %1143 = vmatprep.subr.bf16.mxu0 %v527
        %1144 = vmatpush1.bf16.msra.mxu0 %v526
        %1145 = vmatprep.subr.bf16.mxu0 %v523
        %1146 = vmatpush1.bf16.msra.mxu0 %v522
        %1147 = vmatprep.subr.bf16.mxu0 0
        %1148 = vmatpush2.bf16.msra.mxu0 0
        %1149 = vmatprep.subr.bf16.mxu0 0
        %1150 = vmatpush2.bf16.msra.mxu0 0
        %1151 = vmatprep.subr.bf16.mxu0 0
        %1152 = vmatpush2.bf16.msra.mxu0 0
        %1153 = vmatprep.subr.bf16.mxu0 0
        %1154 = vmatpush2.bf16.msra.mxu0 0
        %1155 = vmatprep.subr.bf16.mxu0 0
        %1156 = vmatpush2.bf16.msra.mxu0 0
        %1157 = vmatprep.subr.bf16.mxu0 0
        %1158 = vmatpush2.bf16.msra.mxu0 0
        %1159 = vmatprep.subr.bf16.mxu0 0
        %1160 = vmatpush2.bf16.msra.mxu0 0
        %1161 = vmatprep.subr.bf16.mxu0 0
        %1162 = vmatpush2.bf16.msra.mxu0 0
        %1163 = vmatprep.mubr.bf16.mxu0 0
        %1164 = vmatmul.mubr.bf16.gmra.mxu0 %v1130
        %v1165 = vpop.f32.mrf.mxu0
        %v1166 = vadd.f32 0.0, %v1165
        %v1167 = vpop.f32.mrf.mxu0
        %v1168 = vadd.f32 0.0, %v1167
        %v1169 = vpop.f32.mrf.mxu0
        %v1170 = vpop.f32.mrf.mxu0
        %1171 = vdwg.mxu0
        %1172 = vmatprep.subr.bf16.mxu0 %v553
        %1173 = vmatpush1.bf16.msra.mxu0 %v552
        %1174 = vmatprep.subr.bf16.mxu0 %v549
        %1175 = vmatpush1.bf16.msra.mxu0 %v548
        %1176 = vmatprep.subr.bf16.mxu0 %v545
        %1177 = vmatpush1.bf16.msra.mxu0 %v544
        %1178 = vmatprep.subr.bf16.mxu0 %v541
        %1179 = vmatpush1.bf16.msra.mxu0 %v540
        %1180 = vmatprep.subr.bf16.mxu0 %v537
        %1181 = vmatpush1.bf16.msra.mxu0 %v536
        %1182 = vmatprep.subr.bf16.mxu0 %v533
        %1183 = vmatpush1.bf16.msra.mxu0 %v532
        %1184 = vmatprep.subr.bf16.mxu0 %v529
        %1185 = vmatpush1.bf16.msra.mxu0 %v528
        %1186 = vmatprep.subr.bf16.mxu0 %v525
        %1187 = vmatpush1.bf16.msra.mxu0 %v524
        %1188 = vmatprep.subr.bf16.mxu0 0
        %1189 = vmatpush2.bf16.msra.mxu0 0
        %1190 = vmatprep.subr.bf16.mxu0 0
        %1191 = vmatpush2.bf16.msra.mxu0 0
        %1192 = vmatprep.subr.bf16.mxu0 0
        %1193 = vmatpush2.bf16.msra.mxu0 0
        %1194 = vmatprep.subr.bf16.mxu0 0
        %1195 = vmatpush2.bf16.msra.mxu0 0
        %1196 = vmatprep.subr.bf16.mxu0 0
        %1197 = vmatpush2.bf16.msra.mxu0 0
        %1198 = vmatprep.subr.bf16.mxu0 0
        %1199 = vmatpush2.bf16.msra.mxu0 0
        %1200 = vmatprep.subr.bf16.mxu0 0
        %1201 = vmatpush2.bf16.msra.mxu0 0
        %1202 = vmatprep.subr.bf16.mxu0 0
        %1203 = vmatpush2.bf16.msra.mxu0 0
        %1204 = vmatprep.mubr.bf16.mxu0 0
        %1205 = vmatmul.mubr.bf16.gmra.mxu0 %v1130
        %v1206 = vpop.f32.mrf.mxu0
        %v1207 = vadd.f32 0.0, %v1206
        %v1208 = vpop.f32.mrf.mxu0
        %v1209 = vadd.f32 0.0, %v1208
        %v1210 = vpop.f32.mrf.mxu0
        %v1211 = vpop.f32.mrf.mxu0
        %1212 = vdwg.mxu0
        %v1213 = vadd.f32 %v1126, %v1166
        %v1214 = vadd.f32 %v1127, %v1168
        %v1215 = vadd.f32 %v1128, %v1207
        %v1216 = vadd.f32 %v1129, %v1209
        %v1217 = vmul.f32 %v1213, 0.5
        %v1218 = vmul.f32 %v1214, 0.5
        %v1219 = vmul.f32 %v1215, 0.5
        %v1220 = vtanh.pop %v1217
        %v1221 = vtanh.pop %v1218
        %v1222 = vtanh.pop %v1219
        %v1223 = vadd.f32 %v1220, 1.0
        %v1224 = vadd.f32 %v1221, 1.0
        %v1225 = vadd.f32 %v1222, 1.0
        %v1226 = vmul.f32 %v1223, 0.5
        %v1227 = vmul.f32 %v1224, 0.5
        %v1228 = vmul.f32 %v1225, 0.5
        %v1229 = vtanh.pop %v1216
        %v1230 = vmul.f32 %v1227, %v1123
        %v1231 = vmul.f32 %v1226, %v1229
        %v1232 = vadd.f32 %v1230, %v1231
        %v1233 = vtanh.pop %v1232
        %v1234 = vmul.f32 %v1228, %v1233
        %v1235 = vld [vmem:[%s368] sm:$0xff]
        %v1236 = vld [vmem:[%s368 + $0x8] sm:$0xff]
        %v1237 = vld [vmem:[%s368 + $0x10] sm:$0xff]
        %v1238 = vld [vmem:[%s368 + $0x18] sm:$0xff]
        %v1239 = vpack.c.bf16 %v1234, %v1234
        %1240 = vmatprep.subr.bf16.mxu0 %v551
        %1241 = vmatpush1.bf16.msra.mxu0 %v550
        %1242 = vmatprep.subr.bf16.mxu0 %v547
        %1243 = vmatpush1.bf16.msra.mxu0 %v546
        %1244 = vmatprep.subr.bf16.mxu0 %v543
        %1245 = vmatpush1.bf16.msra.mxu0 %v542
        %1246 = vmatprep.subr.bf16.mxu0 %v539
        %1247 = vmatpush1.bf16.msra.mxu0 %v538
        %1248 = vmatprep.subr.bf16.mxu0 %v535
        %1249 = vmatpush1.bf16.msra.mxu0 %v534
        %1250 = vmatprep.subr.bf16.mxu0 %v531
        %1251 = vmatpush1.bf16.msra.mxu0 %v530
        %1252 = vmatprep.subr.bf16.mxu0 %v527
        %1253 = vmatpush1.bf16.msra.mxu0 %v526
        %1254 = vmatprep.subr.bf16.mxu0 %v523
        %1255 = vmatpush1.bf16.msra.mxu0 %v522
        %1256 = vmatprep.subr.bf16.mxu0 0
        %1257 = vmatpush2.bf16.msra.mxu0 0
        %1258 = vmatprep.subr.bf16.mxu0 0
        %1259 = vmatpush2.bf16.msra.mxu0 0
        %1260 = vmatprep.subr.bf16.mxu0 0
        %1261 = vmatpush2.bf16.msra.mxu0 0
        %1262 = vmatprep.subr.bf16.mxu0 0
        %1263 = vmatpush2.bf16.msra.mxu0 0
        %1264 = vmatprep.subr.bf16.mxu0 0
        %1265 = vmatpush2.bf16.msra.mxu0 0
        %1266 = vmatprep.subr.bf16.mxu0 0
        %1267 = vmatpush2.bf16.msra.mxu0 0
        %1268 = vmatprep.subr.bf16.mxu0 0
        %1269 = vmatpush2.bf16.msra.mxu0 0
        %1270 = vmatprep.subr.bf16.mxu0 0
        %1271 = vmatpush2.bf16.msra.mxu0 0
        %1272 = vmatprep.mubr.bf16.mxu0 0
        %1273 = vmatmul.mubr.bf16.gmra.mxu0 %v1239
        %v1274 = vpop.f32.mrf.mxu0
        %v1275 = vadd.f32 0.0, %v1274
        %v1276 = vpop.f32.mrf.mxu0
        %v1277 = vadd.f32 0.0, %v1276
        %v1278 = vpop.f32.mrf.mxu0
        %v1279 = vpop.f32.mrf.mxu0
        %1280 = vdwg.mxu0
        %1281 = vmatprep.subr.bf16.mxu0 %v553
        %1282 = vmatpush1.bf16.msra.mxu0 %v552
        %1283 = vmatprep.subr.bf16.mxu0 %v549
        %1284 = vmatpush1.bf16.msra.mxu0 %v548
        %1285 = vmatprep.subr.bf16.mxu0 %v545
        %1286 = vmatpush1.bf16.msra.mxu0 %v544
        %1287 = vmatprep.subr.bf16.mxu0 %v541
        %1288 = vmatpush1.bf16.msra.mxu0 %v540
        %1289 = vmatprep.subr.bf16.mxu0 %v537
        %1290 = vmatpush1.bf16.msra.mxu0 %v536
        %1291 = vmatprep.subr.bf16.mxu0 %v533
        %1292 = vmatpush1.bf16.msra.mxu0 %v532
        %1293 = vmatprep.subr.bf16.mxu0 %v529
        %1294 = vmatpush1.bf16.msra.mxu0 %v528
        %1295 = vmatprep.subr.bf16.mxu0 %v525
        %1296 = vmatpush1.bf16.msra.mxu0 %v524
        %1297 = vmatprep.subr.bf16.mxu0 0
        %1298 = vmatpush2.bf16.msra.mxu0 0
        %1299 = vmatprep.subr.bf16.mxu0 0
        %1300 = vmatpush2.bf16.msra.mxu0 0
        %1301 = vmatprep.subr.bf16.mxu0 0
        %1302 = vmatpush2.bf16.msra.mxu0 0
        %1303 = vmatprep.subr.bf16.mxu0 0
        %1304 = vmatpush2.bf16.msra.mxu0 0
        %1305 = vmatprep.subr.bf16.mxu0 0
        %1306 = vmatpush2.bf16.msra.mxu0 0
        %1307 = vmatprep.subr.bf16.mxu0 0
        %1308 = vmatpush2.bf16.msra.mxu0 0
        %1309 = vmatprep.subr.bf16.mxu0 0
        %1310 = vmatpush2.bf16.msra.mxu0 0
        %1311 = vmatprep.subr.bf16.mxu0 0
        %1312 = vmatpush2.bf16.msra.mxu0 0
        %1313 = vmatprep.mubr.bf16.mxu0 0
        %1314 = vmatmul.mubr.bf16.gmra.mxu0 %v1239
        %v1315 = vpop.f32.mrf.mxu0
        %v1316 = vadd.f32 0.0, %v1315
        %v1317 = vpop.f32.mrf.mxu0
        %v1318 = vadd.f32 0.0, %v1317
        %v1319 = vpop.f32.mrf.mxu0
        %v1320 = vpop.f32.mrf.mxu0
        %1321 = vdwg.mxu0
        %v1322 = vadd.f32 %v1235, %v1275
        %v1323 = vadd.f32 %v1236, %v1277
        %v1324 = vadd.f32 %v1237, %v1316
        %v1325 = vadd.f32 %v1238, %v1318
        %v1326 = vmul.f32 %v1322, 0.5
        %v1327 = vmul.f32 %v1323, 0.5
        %v1328 = vmul.f32 %v1324, 0.5
        %v1329 = vtanh.pop %v1326
        %v1330 = vtanh.pop %v1327
        %v1331 = vtanh.pop %v1328
        %v1332 = vadd.f32 %v1329, 1.0
        %v1333 = vadd.f32 %v1330, 1.0
        %v1334 = vadd.f32 %v1331, 1.0
        %v1335 = vmul.f32 %v1332, 0.5
        %v1336 = vmul.f32 %v1333, 0.5
        %v1337 = vmul.f32 %v1334, 0.5
        %v1338 = vtanh.pop %v1325
        %v1339 = vmul.f32 %v1336, %v1232
        %v1340 = vmul.f32 %v1335, %v1338
        %v1341 = vadd.f32 %v1339, %v1340
        %v1342 = vtanh.pop %v1341
        %v1343 = vmul.f32 %v1337, %v1342
        %v1344 = vld [vmem:[%s385] sm:$0xff]
        %v1345 = vld [vmem:[%s385 + $0x8] sm:$0xff]
        %v1346 = vld [vmem:[%s385 + $0x10] sm:$0xff]
        %v1347 = vld [vmem:[%s385 + $0x18] sm:$0xff]
        %v1348 = vpack.c.bf16 %v1343, %v1343
        %1349 = vmatprep.subr.bf16.mxu0 %v551
        %1350 = vmatpush1.bf16.msra.mxu0 %v550
        %1351 = vmatprep.subr.bf16.mxu0 %v547
        %1352 = vmatpush1.bf16.msra.mxu0 %v546
        %1353 = vmatprep.subr.bf16.mxu0 %v543
        %1354 = vmatpush1.bf16.msra.mxu0 %v542
        %1355 = vmatprep.subr.bf16.mxu0 %v539
        %1356 = vmatpush1.bf16.msra.mxu0 %v538
        %1357 = vmatprep.subr.bf16.mxu0 %v535
        %1358 = vmatpush1.bf16.msra.mxu0 %v534
        %1359 = vmatprep.subr.bf16.mxu0 %v531
        %1360 = vmatpush1.bf16.msra.mxu0 %v530
        %1361 = vmatprep.subr.bf16.mxu0 %v527
        %1362 = vmatpush1.bf16.msra.mxu0 %v526
        %1363 = vmatprep.subr.bf16.mxu0 %v523
        %1364 = vmatpush1.bf16.msra.mxu0 %v522
        %1365 = vmatprep.subr.bf16.mxu0 0
        %1366 = vmatpush2.bf16.msra.mxu0 0
        %1367 = vmatprep.subr.bf16.mxu0 0
        %1368 = vmatpush2.bf16.msra.mxu0 0
        %1369 = vmatprep.subr.bf16.mxu0 0
        %1370 = vmatpush2.bf16.msra.mxu0 0
        %1371 = vmatprep.subr.bf16.mxu0 0
        %1372 = vmatpush2.bf16.msra.mxu0 0
        %1373 = vmatprep.subr.bf16.mxu0 0
        %1374 = vmatpush2.bf16.msra.mxu0 0
        %1375 = vmatprep.subr.bf16.mxu0 0
        %1376 = vmatpush2.bf16.msra.mxu0 0
        %1377 = vmatprep.subr.bf16.mxu0 0
        %1378 = vmatpush2.bf16.msra.mxu0 0
        %1379 = vmatprep.subr.bf16.mxu0 0
        %1380 = vmatpush2.bf16.msra.mxu0 0
        %1381 = vmatprep.mubr.bf16.mxu0 0
        %1382 = vmatmul.mubr.bf16.gmra.mxu0 %v1348
        %v1383 = vpop.f32.mrf.mxu0
        %v1384 = vadd.f32 0.0, %v1383
        %v1385 = vpop.f32.mrf.mxu0
        %v1386 = vadd.f32 0.0, %v1385
        %v1387 = vpop.f32.mrf.mxu0
        %v1388 = vpop.f32.mrf.mxu0
        %1389 = vdwg.mxu0
        %1390 = vmatprep.subr.bf16.mxu0 %v553
        %1391 = vmatpush1.bf16.msra.mxu0 %v552
        %1392 = vmatprep.subr.bf16.mxu0 %v549
        %1393 = vmatpush1.bf16.msra.mxu0 %v548
        %1394 = vmatprep.subr.bf16.mxu0 %v545
        %1395 = vmatpush1.bf16.msra.mxu0 %v544
        %1396 = vmatprep.subr.bf16.mxu0 %v541
        %1397 = vmatpush1.bf16.msra.mxu0 %v540
        %1398 = vmatprep.subr.bf16.mxu0 %v537
        %1399 = vmatpush1.bf16.msra.mxu0 %v536
        %1400 = vmatprep.subr.bf16.mxu0 %v533
        %1401 = vmatpush1.bf16.msra.mxu0 %v532
        %1402 = vmatprep.subr.bf16.mxu0 %v529
        %1403 = vmatpush1.bf16.msra.mxu0 %v528
        %1404 = vmatprep.subr.bf16.mxu0 %v525
        %1405 = vmatpush1.bf16.msra.mxu0 %v524
        %1406 = vmatprep.subr.bf16.mxu0 0
        %1407 = vmatpush2.bf16.msra.mxu0 0
        %1408 = vmatprep.subr.bf16.mxu0 0
        %1409 = vmatpush2.bf16.msra.mxu0 0
        %1410 = vmatprep.subr.bf16.mxu0 0
        %1411 = vmatpush2.bf16.msra.mxu0 0
        %1412 = vmatprep.subr.bf16.mxu0 0
        %1413 = vmatpush2.bf16.msra.mxu0 0
        %1414 = vmatprep.subr.bf16.mxu0 0
        %1415 = vmatpush2.bf16.msra.mxu0 0
        %1416 = vmatprep.subr.bf16.mxu0 0
        %1417 = vmatpush2.bf16.msra.mxu0 0
        %1418 = vmatprep.subr.bf16.mxu0 0
        %1419 = vmatpush2.bf16.msra.mxu0 0
        %1420 = vmatprep.subr.bf16.mxu0 0
        %1421 = vmatpush2.bf16.msra.mxu0 0
        %1422 = vmatprep.mubr.bf16.mxu0 0
        %1423 = vmatmul.mubr.bf16.gmra.mxu0 %v1348
        %v1424 = vpop.f32.mrf.mxu0
        %v1425 = vadd.f32 0.0, %v1424
        %v1426 = vpop.f32.mrf.mxu0
        %v1427 = vadd.f32 0.0, %v1426
        %v1428 = vpop.f32.mrf.mxu0
        %v1429 = vpop.f32.mrf.mxu0
        %1430 = vdwg.mxu0
        %v1431 = vadd.f32 %v1344, %v1384
        %v1432 = vadd.f32 %v1345, %v1386
        %v1433 = vadd.f32 %v1346, %v1425
        %v1434 = vadd.f32 %v1347, %v1427
        %v1435 = vmul.f32 %v1431, 0.5
        %v1436 = vmul.f32 %v1432, 0.5
        %v1437 = vmul.f32 %v1433, 0.5
        %v1438 = vtanh.pop %v1435
        %v1439 = vtanh.pop %v1436
        %v1440 = vtanh.pop %v1437
        %v1441 = vadd.f32 %v1438, 1.0
        %v1442 = vadd.f32 %v1439, 1.0
        %v1443 = vadd.f32 %v1440, 1.0
        %v1444 = vmul.f32 %v1441, 0.5
        %v1445 = vmul.f32 %v1442, 0.5
        %v1446 = vmul.f32 %v1443, 0.5
        %v1447 = vtanh.pop %v1434
        %v1448 = vmul.f32 %v1445, %v1341
        %v1449 = vmul.f32 %v1444, %v1447
        %v1450 = vadd.f32 %v1448, %v1449
        %v1451 = vtanh.pop %v1450
        %v1452 = vmul.f32 %v1446, %v1451
        %1453 = vst [vmem:[%s203] sm:$0xff] %v1452
        %s1454 = sand.u32 %s116, 1
        %s1455 = scalar_lea.sflag [#allocation5], %s1454
        %s1456 = sand.u32 %s116, 1
        %s1457 = smul.addr %s1456, 8
        %s1458 = scalar_lea.vmem [#allocation6], %s1457
        // Predicated region
        $region41: #{tpu_custom_call.1} parent=35 // pred_check
          %p1459 = pneg %p126
        $region42: #{tpu_custom_call.1} parent=35 // pred_check_branch
          %1461 = sbr.rel (%p1459) target = $region44
        $region43: #{tpu_custom_call.1} parent=35 // pred_region
          %s1463 = ssub.s32 128, 128
          %1464 = vsyncadd %s1455, %s1463
          %s1465 = smul.addr %s19, 128
          %s1466 = scalar_lea.hbm %s4, %s1465
          %s1468 = sshll.u32 %s1458, 4
          %s1469 = int_to_ptr.vmem [resolvable:$true] %s1468
          %1471 = dma.vmem_to_hbm [thread:$0]  %s1469, 128, %s1466, %s1455
        $region44: #{tpu_custom_call.1} parent=35 // pred_fallthru
          _
      $region36: #{tpu_custom_call.1} parent=5 // pred_fallthru
        _
      %p1472 = scmp.le.s32.totalorder 2, %s14
      // Predicated region
      $region45: #{tpu_custom_call.1} parent=5 // pred_check
        %p1473 = pneg %p1472
      $region46: #{tpu_custom_call.1} parent=5 // pred_check_branch
        %1475 = sbr.rel (%p1473) target = $region48
      $region47: #{tpu_custom_call.1} parent=5 // pred_region
        %s1476 = ssub.s32 %s14, 2
        // Predicated region
        $region49: #{tpu_custom_call.1} parent=47 // pred_check
          %p1477 = pneg %p132
        $region50: #{tpu_custom_call.1} parent=47 // pred_check_branch
          %1479 = sbr.rel (%p1477) target = $region52
        $region51: #{tpu_custom_call.1} parent=47 // pred_region
          %s1480 = sand.u32 %s117, 1
          %s1481 = scalar_lea.sflag [#allocation5], %s1480
          %s1482 = sand.u32 %s117, 1
          %s1483 = smul.addr %s1482, 8
          %s1484 = scalar_lea.vmem [#allocation6], %s1483
          %1485 = dma.done %s1481, 128
        $region52: #{tpu_custom_call.1} parent=47 // pred_fallthru
          _
      $region48: #{tpu_custom_call.1} parent=5 // pred_fallthru
        _
    $region6: #{tpu_custom_call.1} parent=1 // loop_footer
      %s18 = sadd.s32 1, %s14
    $region7: #{tpu_custom_call.1} parent=1 // loop_footer_branch
      %13 = sbr.rel target = $region3
    $region8: #{tpu_custom_call.1} parent=1 // loop_exit
      _
    %1486 = vsyncpa [#allocation4], 1
    %s1487 = scalar_lea.sflag [#allocation4], 1
    %1488 = vsyncpa %s1487, 1
    %1489 = vsyncpa [#allocation5], 1
    %s1490 = scalar_lea.sflag [#allocation5], 1
    %1491 = vsyncpa %s1490, 1

</llo_original>
